<compile_context>
chip_gen: v6e
topology: v6e:2x2x1
jax: 0.10.0
libtpu: 0.0.40
codegen_flags: <defaults>
</compile_context>

<pallas_src>
import jax
import jax.numpy as jnp
from jax.experimental import pallas as pl
from jax.experimental.pallas import tpu as pltpu

LN_EPS = 1e-5
_INV_SQRT2 = 0.7071067811865476


def _projection_kernel(x_ref, pw_ref, fw_ref, vec_ref, o_ref):
    # Packed per-feature vectors: row 0 = proj bias, 1 = fc bias,
    # 2 = LN gamma, 3 = LN beta.  One DMA instead of four.
    vec = vec_ref[...].astype(jnp.float32)             # (4, out_dim)
    pb, fb = vec[0:1], vec[1:2]
    gamma, beta = vec[2:3], vec[3:4]

    # proj: Linear(in_dim -> out_dim).  MXU in the weight's native dtype
    # (no-op cast for f32 params, bf16 fast path for bf16 params); f32 acc.
    projected = jnp.dot(x_ref[...].astype(pw_ref.dtype), pw_ref[...],
                        preferred_element_type=jnp.float32) + pb

    # Exact erf-based GELU (matches torch.nn.GELU() default), in f32.
    h = 0.5 * projected * (1.0 + jax.lax.erf(projected * jnp.float32(_INV_SQRT2)))

    # fc: Linear(out_dim -> out_dim); f32 accumulation.
    h = jnp.dot(h.astype(fw_ref.dtype), fw_ref[...],
                preferred_element_type=jnp.float32) + fb

    # Dropout: identity in eval / inference mode.
    # TODO(synk): training-mode dropout (pltpu.prng_random_bits mask) not wired.

    # Residual + LayerNorm over the feature (last) axis, eps=1e-5, affine.
    y = h + projected
    mean = jnp.mean(y, axis=-1, keepdims=True)
    cent = y - mean
    var = jnp.mean(cent * cent, axis=-1, keepdims=True)
    normed = cent * jax.lax.rsqrt(var + jnp.float32(LN_EPS))
    o_ref[...] = (normed * gamma + beta).astype(o_ref.dtype)


def prepare_projection_params(proj_w, proj_b, fc_w, fc_b, ln_gamma, ln_beta):
    """One-time parameter prep (hoists transposes / packing out of the
    per-call path).  proj_w: (out_dim, in_dim), fc_w: (out_dim, out_dim) in
    PyTorch nn.Linear layout."""
    vec = jnp.stack([jnp.asarray(proj_b), jnp.asarray(fc_b),
                     jnp.asarray(ln_gamma), jnp.asarray(ln_beta)], axis=0)
    return {
        "pw": jnp.asarray(proj_w).T,    # (in_dim, out_dim)
        "fw": jnp.asarray(fc_w).T,      # (out_dim, out_dim)
        "vec": vec,                     # (4, out_dim)
    }


def _round_up(a, m):
    return (a + m - 1) // m * m


def _cdiv(a, b):
    return -(-a // b)


def _pick_tile(B, batch_tile):
    """Row tile: multiple of 8, capped at batch_tile, with an even number of
    grid steps when possible (balances v7x's two TensorCores)."""
    tile = min(batch_tile, _round_up(B, 8))
    steps = _cdiv(B, tile)
    if steps % 2 == 1 and B > 8:
        steps += 1
        tile = max(8, _round_up(_cdiv(B, steps), 8))
        steps = _cdiv(B, tile)
    return tile, steps


def _run_projection(x, pw, fw, vec, *, tile, steps, single_buffer):
    B, in_dim = x.shape
    out_dim = pw.shape[1]
    itemsize = lambda a: jnp.dtype(a.dtype).itemsize

    # VMEM budget from actual shapes: weights (x buffer count) + double-
    # buffered x/out tiles + f32 intermediates, with headroom; capped at 3/4
    # of the per-core VMEM capacity (48 MiB on v7x, 96 MiB on v5e/v6e).
    weight_bufs = 1 if single_buffer else 2
    need = (weight_bufs * (pw.size * itemsize(pw) + fw.size * itemsize(fw)
                           + vec.size * itemsize(vec))
            + 2 * tile * in_dim * itemsize(x)
            + 2 * tile * out_dim * itemsize(x)
            + 4 * tile * out_dim * 4)
    try:
        vmem_cap = int(pltpu.get_tpu_info().vmem_capacity_bytes)
    except Exception:
        vmem_cap = 64 * 1024 * 1024  # conservative (v7x per-core)
    vmem_limit = max(16 << 20, int(need * 1.5) + (4 << 20))
    vmem_limit = min(vmem_limit, (vmem_cap * 3) // 4)

    # Advisory cost estimate so XLA schedules surrounding HLO sensibly.
    cost = pl.CostEstimate(
        flops=int(2 * B * in_dim * out_dim + 2 * B * out_dim * out_dim
                  + 10 * B * out_dim),
        transcendentals=int(B * out_dim + B),
        bytes_accessed=int(x.size * itemsize(x) + pw.size * itemsize(pw)
                           + fw.size * itemsize(fw) + vec.size * itemsize(vec)
                           + B * out_dim * itemsize(x)),
    )

    full = lambda i: (0, 0)
    weight_mode = pl.Buffered(1) if single_buffer else None

    return pl.pallas_call(
        _projection_kernel,
        out_shape=jax.ShapeDtypeStruct((B, out_dim), x.dtype),
        grid_spec=pltpu.PrefetchScalarGridSpec(
            num_scalar_prefetch=0,
            grid=(steps,),
            in_specs=[
                pl.BlockSpec((tile, in_dim), lambda i: (i, 0)),       # x tile
                pl.BlockSpec((in_dim, out_dim), full,
                             pipeline_mode=weight_mode),              # proj W^T
                pl.BlockSpec((out_dim, out_dim), full,
                             pipeline_mode=weight_mode),              # fc W^T
                pl.BlockSpec((4, out_dim), full,
                             pipeline_mode=weight_mode),              # packed vecs
            ],
            out_specs=pl.BlockSpec((tile, out_dim), lambda i: (i, 0)),
        ),
        compiler_params=pltpu.CompilerParams(
            dimension_semantics=("parallel",),
            vmem_limit_bytes=int(vmem_limit)),
        cost_estimate=cost,
    )(x, pw, fw, vec)


def projection_forward(x, params, *, batch_tile=256):
    """x: (B, in_dim). params: output of prepare_projection_params."""
    B, _ = x.shape
    pw, fw, vec = params["pw"], params["fw"], params["vec"]
    tile, steps = _pick_tile(B, batch_tile)
    try:
        return _run_projection(x, pw, fw, vec, tile=tile, steps=steps,
                               single_buffer=True)
    except Exception:
        # TODO(synk): drop this fallback once pl.Buffered(1) single-buffering
        # of grid-invariant operands is guaranteed on all deployed jaxlibs.
        return _run_projection(x, pw, fw, vec, tile=tile, steps=steps,
                               single_buffer=False)


def projection_reference(x, proj_w, proj_b, fc_w, fc_b, ln_gamma, ln_beta):
    xf = x.astype(jnp.float32)
    projected = xf @ proj_w.T.astype(jnp.float32) + proj_b
    h = 0.5 * projected * (1.0 + jax.lax.erf(projected * _INV_SQRT2))
    h = h @ fc_w.T.astype(jnp.float32) + fc_b
    y = h + projected
    mean = jnp.mean(y, axis=-1, keepdims=True)
    var = jnp.mean((y - mean) ** 2, axis=-1, keepdims=True)
    normed = (y - mean) * jax.lax.rsqrt(var + LN_EPS)
    return (normed * ln_gamma + ln_beta).astype(x.dtype)


if __name__ == "__main__":
    # Small shapes consistent with the module.  B is deliberately not a
    # multiple of the row tile to exercise the ragged-last-block path, and
    # the tile picker yields 2 grid steps so both v7x TensorCores get work.
    B, IN_DIM, OUT_DIM = 200, 32, 128
    key = jax.random.PRNGKey(0)
    kx, kpw, kpb, kfw, kfb = jax.random.split(key, 5)

    x = jax.random.normal(kx, (B, IN_DIM), dtype=jnp.float32)

    # Deterministic synthetic parameters (PyTorch nn.Linear shapes).
    bound_p = 1.0 / (IN_DIM ** 0.5)
    proj_w = jax.random.uniform(kpw, (OUT_DIM, IN_DIM), minval=-bound_p,
                                maxval=bound_p, dtype=jnp.float32)
    proj_b = jax.random.uniform(kpb, (OUT_DIM,), minval=-bound_p,
                                maxval=bound_p, dtype=jnp.float32)
    bound_f = 1.0 / (OUT_DIM ** 0.5)
    fc_w = jax.random.uniform(kfw, (OUT_DIM, OUT_DIM), minval=-bound_f,
                              maxval=bound_f, dtype=jnp.float32)
    fc_b = jax.random.uniform(kfb, (OUT_DIM,), minval=-bound_f,
                              maxval=bound_f, dtype=jnp.float32)
    ln_gamma = jnp.ones((OUT_DIM,), dtype=jnp.float32)
    ln_beta = jnp.zeros((OUT_DIM,), dtype=jnp.float32)

    # One-time parameter prep (transposes / packing hoisted out of the
    # per-call path).
    params = prepare_projection_params(proj_w, proj_b, fc_w, fc_b,
                                       ln_gamma, ln_beta)

    out = projection_forward(x, params)
    out = jax.block_until_ready(out)

    ref = projection_reference(x, proj_w, proj_b, fc_w, fc_b,
                               ln_gamma, ln_beta)
    assert out.shape == (B, OUT_DIM)
    assert jnp.allclose(out, ref, atol=1e-4, rtol=1e-4)

    print("KERNEL_OK")
</pallas_src>

<mosaic_0001>
module attributes {stable_mosaic.version = 11 : i64} {
  func.func @_projection_kernel(%arg0: i32, %arg1: memref<104x32xf32, #tpu.memory_space<vmem>>, %arg2: memref<32x128xf32, #tpu.memory_space<vmem>>, %arg3: memref<128x128xf32, #tpu.memory_space<vmem>>, %arg4: memref<4x128xf32, #tpu.memory_space<vmem>>, %arg5: memref<104x128xf32, #tpu.memory_space<vmem>>) attributes {dimension_semantics = [#tpu.dimension_semantics<parallel>], iteration_bounds = array<i64: 2>, scalar_prefetch = 0 : i64, scratch_operands = 0 : i64, tpu.core_type = #tpu.core_type<tc>, window_params = [{transform_indices = @transform_0, window_bounds = array<i64: 104, 32>}, {pipeline_mode = #tpu.pipeline_mode<synchronous>, transform_indices = @transform_1, window_bounds = array<i64: 32, 128>}, {pipeline_mode = #tpu.pipeline_mode<synchronous>, transform_indices = @transform_2, window_bounds = array<i64: 128, 128>}, {pipeline_mode = #tpu.pipeline_mode<synchronous>, transform_indices = @transform_3, window_bounds = array<i64: 4, 128>}, {transform_indices = @transform_4, window_bounds = array<i64: 104, 128>}]} {
    %c0 = arith.constant 0 : index
    %c0_0 = arith.constant 0 : index
    %0 = vector.load %arg4[%c0, %c0_0] : memref<4x128xf32, #tpu.memory_space<vmem>>, vector<4x128xf32>
    %1 = vector.extract_strided_slice %0 {offsets = [0, 0], sizes = [1, 128], strides = [1, 1]} : vector<4x128xf32> to vector<1x128xf32>
    %2 = vector.extract_strided_slice %0 {offsets = [1, 0], sizes = [1, 128], strides = [1, 1]} : vector<4x128xf32> to vector<1x128xf32>
    %3 = vector.extract_strided_slice %0 {offsets = [2, 0], sizes = [1, 128], strides = [1, 1]} : vector<4x128xf32> to vector<1x128xf32>
    %4 = vector.extract_strided_slice %0 {offsets = [3, 0], sizes = [1, 128], strides = [1, 1]} : vector<4x128xf32> to vector<1x128xf32>
    %c0_1 = arith.constant 0 : index
    %c0_2 = arith.constant 0 : index
    %5 = vector.load %arg1[%c0_1, %c0_2] : memref<104x32xf32, #tpu.memory_space<vmem>>, vector<104x32xf32>
    %c0_3 = arith.constant 0 : index
    %c0_4 = arith.constant 0 : index
    %6 = vector.load %arg2[%c0_3, %c0_4] : memref<32x128xf32, #tpu.memory_space<vmem>>, vector<32x128xf32>
    %cst = arith.constant dense<0.000000e+00> : vector<104x128xf32>
    %7 = tpu.matmul %5, %6, %cst {dimension_numbers = #tpu.dot_dimension_numbers<[1], [0], [0], [1], [0, 0, 1, 1], [], []>} : vector<104x32xf32>, vector<32x128xf32>, vector<104x128xf32> -> vector<104x128xf32>
    %8 = vector.broadcast %1 : vector<1x128xf32> to vector<104x128xf32>
    %9 = arith.addf %7, %8 : vector<104x128xf32>
    %cst_5 = arith.constant 5.000000e-01 : f32
    %10 = vector.broadcast %cst_5 : f32 to vector<104x128xf32>
    %11 = arith.mulf %10, %9 : vector<104x128xf32>
    %cst_6 = arith.constant 0.707106769 : f32
    %12 = vector.broadcast %cst_6 : f32 to vector<104x128xf32>
    %13 = arith.mulf %9, %12 : vector<104x128xf32>
    %14 = math.erf %13 : vector<104x128xf32>
    %cst_7 = arith.constant 1.000000e+00 : f32
    %15 = vector.broadcast %cst_7 : f32 to vector<104x128xf32>
    %16 = arith.addf %15, %14 : vector<104x128xf32>
    %17 = arith.mulf %11, %16 : vector<104x128xf32>
    %c0_8 = arith.constant 0 : index
    %c0_9 = arith.constant 0 : index
    %18 = vector.load %arg3[%c0_8, %c0_9] : memref<128x128xf32, #tpu.memory_space<vmem>>, vector<128x128xf32>
    %cst_10 = arith.constant dense<0.000000e+00> : vector<104x128xf32>
    %19 = tpu.matmul %17, %18, %cst_10 {dimension_numbers = #tpu.dot_dimension_numbers<[1], [0], [0], [1], [0, 0, 1, 1], [], []>} : vector<104x128xf32>, vector<128x128xf32>, vector<104x128xf32> -> vector<104x128xf32>
    %20 = vector.broadcast %2 : vector<1x128xf32> to vector<104x128xf32>
    %21 = arith.addf %19, %20 : vector<104x128xf32>
    %22 = arith.addf %21, %9 : vector<104x128xf32>
    %cst_11 = arith.constant dense<0.000000e+00> : vector<104xf32>
    %23 = vector.multi_reduction <add>, %22, %cst_11 [1] : vector<104x128xf32> to vector<104xf32>
    %24 = vector.shape_cast %23 : vector<104xf32> to vector<104x1xf32>
    %cst_12 = arith.constant 1.280000e+02 : f32
    %25 = vector.broadcast %cst_12 : f32 to vector<104x1xf32>
    %26 = arith.divf %24, %25 : vector<104x1xf32>
    %27 = vector.broadcast %26 : vector<104x1xf32> to vector<104x128xf32>
    %28 = arith.subf %22, %27 : vector<104x128xf32>
    %29 = arith.mulf %28, %28 : vector<104x128xf32>
    %cst_13 = arith.constant dense<0.000000e+00> : vector<104xf32>
    %30 = vector.multi_reduction <add>, %29, %cst_13 [1] : vector<104x128xf32> to vector<104xf32>
    %31 = vector.shape_cast %30 : vector<104xf32> to vector<104x1xf32>
    %cst_14 = arith.constant 1.280000e+02 : f32
    %32 = vector.broadcast %cst_14 : f32 to vector<104x1xf32>
    %33 = arith.divf %31, %32 : vector<104x1xf32>
    %cst_15 = arith.constant 9.99999974E-6 : f32
    %34 = vector.broadcast %cst_15 : f32 to vector<104x1xf32>
    %35 = arith.addf %33, %34 : vector<104x1xf32>
    %36 = math.rsqrt %35 : vector<104x1xf32>
    %37 = vector.broadcast %36 : vector<104x1xf32> to vector<104x128xf32>
    %38 = arith.mulf %28, %37 : vector<104x128xf32>
    %39 = vector.broadcast %3 : vector<1x128xf32> to vector<104x128xf32>
    %40 = arith.mulf %38, %39 : vector<104x128xf32>
    %41 = vector.broadcast %4 : vector<1x128xf32> to vector<104x128xf32>
    %42 = arith.addf %40, %41 : vector<104x128xf32>
    %c0_16 = arith.constant 0 : index
    %c0_17 = arith.constant 0 : index
    %43 = vector.load %arg5[%c0_16, %c0_17] : memref<104x128xf32, #tpu.memory_space<vmem>>, vector<104x128xf32>
    tpu.vector_store %arg5[%c0_16, %c0_17], %42 {strides = array<i32>} : memref<104x128xf32, #tpu.memory_space<vmem>>, vector<104x128xf32>,
    return
  }
  func.func @transform_0(%arg0: i32) -> (i32, i32) {
    %c0_i32 = arith.constant 0 : i32
    %c0_i32_0 = arith.constant 0 : i32
    return %arg0, %c0_i32 : i32, i32
  }
  func.func @transform_1(%arg0: i32) -> (i32, i32) {
    %c0_i32 = arith.constant 0 : i32
    %c0_i32_0 = arith.constant 0 : i32
    %c0_i32_1 = arith.constant 0 : i32
    return %c0_i32, %c0_i32_0 : i32, i32
  }
  func.func @transform_2(%arg0: i32) -> (i32, i32) {
    %c0_i32 = arith.constant 0 : i32
    %c0_i32_0 = arith.constant 0 : i32
    %c0_i32_1 = arith.constant 0 : i32
    return %c0_i32, %c0_i32_0 : i32, i32
  }
  func.func @transform_3(%arg0: i32) -> (i32, i32) {
    %c0_i32 = arith.constant 0 : i32
    %c0_i32_0 = arith.constant 0 : i32
    %c0_i32_1 = arith.constant 0 : i32
    return %c0_i32, %c0_i32_0 : i32, i32
  }
  func.func @transform_4(%arg0: i32) -> (i32, i32) {
    %c0_i32 = arith.constant 0 : i32
    %c0_i32_0 = arith.constant 0 : i32
    return %arg0, %c0_i32 : i32, i32
  }
}

module attributes {stable_mosaic.version = 11 : i64} {
  func.func @_projection_kernel(%arg0: i32, %arg1: memref<104x32xf32, #tpu.memory_space<vmem>>, %arg2: memref<32x128xf32, #tpu.memory_space<vmem>>, %arg3: memref<128x128xf32, #tpu.memory_space<vmem>>, %arg4: memref<4x128xf32, #tpu.memory_space<vmem>>, %arg5: memref<104x128xf32, #tpu.memory_space<vmem>>) attributes {dimension_semantics = [#tpu.dimension_semantics<parallel>], iteration_bounds = array<i64: 2>, scalar_prefetch = 0 : i64, scratch_operands = 0 : i64, tpu.core_type = #tpu.core_type<tc>, window_params = [{transform_indices = @transform_0, window_bounds = array<i64: 104, 32>}, {pipeline_mode = #tpu.pipeline_mode<synchronous>, transform_indices = @transform_1, window_bounds = array<i64: 32, 128>}, {pipeline_mode = #tpu.pipeline_mode<synchronous>, transform_indices = @transform_2, window_bounds = array<i64: 128, 128>}, {pipeline_mode = #tpu.pipeline_mode<synchronous>, transform_indices = @transform_3, window_bounds = array<i64: 4, 128>}, {transform_indices = @transform_4, window_bounds = array<i64: 104, 128>}]} {
    %c0 = arith.constant 0 : index
    %c0_0 = arith.constant 0 : index
    %0 = vector.load %arg4[%c0, %c0_0] : memref<4x128xf32, #tpu.memory_space<vmem>>, vector<4x128xf32>
    %1 = vector.extract_strided_slice %0 {offsets = [0, 0], sizes = [1, 128], strides = [1, 1]} : vector<4x128xf32> to vector<1x128xf32>
    %2 = vector.extract_strided_slice %0 {offsets = [1, 0], sizes = [1, 128], strides = [1, 1]} : vector<4x128xf32> to vector<1x128xf32>
    %3 = vector.extract_strided_slice %0 {offsets = [2, 0], sizes = [1, 128], strides = [1, 1]} : vector<4x128xf32> to vector<1x128xf32>
    %4 = vector.extract_strided_slice %0 {offsets = [3, 0], sizes = [1, 128], strides = [1, 1]} : vector<4x128xf32> to vector<1x128xf32>
    %c0_1 = arith.constant 0 : index
    %c0_2 = arith.constant 0 : index
    %5 = vector.load %arg1[%c0_1, %c0_2] : memref<104x32xf32, #tpu.memory_space<vmem>>, vector<104x32xf32>
    %c0_3 = arith.constant 0 : index
    %c0_4 = arith.constant 0 : index
    %6 = vector.load %arg2[%c0_3, %c0_4] : memref<32x128xf32, #tpu.memory_space<vmem>>, vector<32x128xf32>
    %cst = arith.constant dense<0.000000e+00> : vector<104x128xf32>
    %7 = tpu.matmul %5, %6, %cst {dimension_numbers = #tpu.dot_dimension_numbers<[1], [0], [0], [1], [0, 0, 1, 1], [], []>} : vector<104x32xf32>, vector<32x128xf32>, vector<104x128xf32> -> vector<104x128xf32>
    %8 = vector.broadcast %1 : vector<1x128xf32> to vector<104x128xf32>
    %9 = arith.addf %7, %8 : vector<104x128xf32>
    %cst_5 = arith.constant 5.000000e-01 : f32
    %10 = vector.broadcast %cst_5 : f32 to vector<104x128xf32>
    %11 = arith.mulf %10, %9 : vector<104x128xf32>
    %cst_6 = arith.constant 0.707106769 : f32
    %12 = vector.broadcast %cst_6 : f32 to vector<104x128xf32>
    %13 = arith.mulf %9, %12 : vector<104x128xf32>
    %14 = math.erf %13 : vector<104x128xf32>
    %cst_7 = arith.constant 1.000000e+00 : f32
    %15 = vector.broadcast %cst_7 : f32 to vector<104x128xf32>
    %16 = arith.addf %15, %14 : vector<104x128xf32>
    %17 = arith.mulf %11, %16 : vector<104x128xf32>
    %c0_8 = arith.constant 0 : index
    %c0_9 = arith.constant 0 : index
    %18 = vector.load %arg3[%c0_8, %c0_9] : memref<128x128xf32, #tpu.memory_space<vmem>>, vector<128x128xf32>
    %cst_10 = arith.constant dense<0.000000e+00> : vector<104x128xf32>
    %19 = tpu.matmul %17, %18, %cst_10 {dimension_numbers = #tpu.dot_dimension_numbers<[1], [0], [0], [1], [0, 0, 1, 1], [], []>} : vector<104x128xf32>, vector<128x128xf32>, vector<104x128xf32> -> vector<104x128xf32>
    %20 = vector.broadcast %2 : vector<1x128xf32> to vector<104x128xf32>
    %21 = arith.addf %19, %20 : vector<104x128xf32>
    %22 = arith.addf %21, %9 : vector<104x128xf32>
    %cst_11 = arith.constant dense<0.000000e+00> : vector<104xf32>
    %23 = vector.multi_reduction <add>, %22, %cst_11 [1] : vector<104x128xf32> to vector<104xf32>
    %24 = vector.shape_cast %23 : vector<104xf32> to vector<104x1xf32>
    %cst_12 = arith.constant 1.280000e+02 : f32
    %25 = vector.broadcast %cst_12 : f32 to vector<104x1xf32>
    %26 = arith.divf %24, %25 : vector<104x1xf32>
    %27 = vector.broadcast %26 : vector<104x1xf32> to vector<104x128xf32>
    %28 = arith.subf %22, %27 : vector<104x128xf32>
    %29 = arith.mulf %28, %28 : vector<104x128xf32>
    %cst_13 = arith.constant dense<0.000000e+00> : vector<104xf32>
    %30 = vector.multi_reduction <add>, %29, %cst_13 [1] : vector<104x128xf32> to vector<104xf32>
    %31 = vector.shape_cast %30 : vector<104xf32> to vector<104x1xf32>
    %cst_14 = arith.constant 1.280000e+02 : f32
    %32 = vector.broadcast %cst_14 : f32 to vector<104x1xf32>
    %33 = arith.divf %31, %32 : vector<104x1xf32>
    %cst_15 = arith.constant 9.99999974E-6 : f32
    %34 = vector.broadcast %cst_15 : f32 to vector<104x1xf32>
    %35 = arith.addf %33, %34 : vector<104x1xf32>
    %36 = math.rsqrt %35 : vector<104x1xf32>
    %37 = vector.broadcast %36 : vector<104x1xf32> to vector<104x128xf32>
    %38 = arith.mulf %28, %37 : vector<104x128xf32>
    %39 = vector.broadcast %3 : vector<1x128xf32> to vector<104x128xf32>
    %40 = arith.mulf %38, %39 : vector<104x128xf32>
    %41 = vector.broadcast %4 : vector<1x128xf32> to vector<104x128xf32>
    %42 = arith.addf %40, %41 : vector<104x128xf32>
    %c0_16 = arith.constant 0 : index
    %c0_17 = arith.constant 0 : index
    %43 = vector.load %arg5[%c0_16, %c0_17] : memref<104x128xf32, #tpu.memory_space<vmem>>, vector<104x128xf32>
    tpu.vector_store %arg5[%c0_16, %c0_17], %42 {strides = array<i32>} : memref<104x128xf32, #tpu.memory_space<vmem>>, vector<104x128xf32>,
    return
  }
  func.func @transform_0(%arg0: i32) -> (i32, i32) {
    %c0_i32 = arith.constant 0 : i32
    %c0_i32_0 = arith.constant 0 : i32
    return %arg0, %c0_i32 : i32, i32
  }
  func.func @transform_1(%arg0: i32) -> (i32, i32) {
    %c0_i32 = arith.constant 0 : i32
    %c0_i32_0 = arith.constant 0 : i32
    %c0_i32_1 = arith.constant 0 : i32
    return %c0_i32, %c0_i32_0 : i32, i32
  }
  func.func @transform_2(%arg0: i32) -> (i32, i32) {
    %c0_i32 = arith.constant 0 : i32
    %c0_i32_0 = arith.constant 0 : i32
    %c0_i32_1 = arith.constant 0 : i32
    return %c0_i32, %c0_i32_0 : i32, i32
  }
  func.func @transform_3(%arg0: i32) -> (i32, i32) {
    %c0_i32 = arith.constant 0 : i32
    %c0_i32_0 = arith.constant 0 : i32
    %c0_i32_1 = arith.constant 0 : i32
    return %c0_i32, %c0_i32_0 : i32, i32
  }
  func.func @transform_4(%arg0: i32) -> (i32, i32) {
    %c0_i32 = arith.constant 0 : i32
    %c0_i32_0 = arith.constant 0 : i32
    return %arg0, %c0_i32 : i32, i32
  }
}

</mosaic_0001>

<llo_original>
// kernel: tpu_custom_call.1
$region0: #{tpu_custom_call.1}
  #allocation0 [shape = 'u32[]', space=smem, size = 0x4, offset = 0x4, fixed_abs, tag = 'smem constant byte address 0x4 - core index']
  #allocation1 [shape = 'u32[144,128]{1,0:T(1,128)}', space=vmem, size = 0x12000, scoped, tag = 'internal scratch']
  %s0 = inlined_call_operand.vmem [shape: f32[200,32], index: 0, kind: input, shape index: {}]
  %s1 = inlined_call_operand.vmem [shape: f32[32,128], index: 1, kind: input, shape index: {}]
  %s2 = inlined_call_operand.vmem [shape: f32[128,128], index: 2, kind: input, shape index: {}]
  %s3 = inlined_call_operand.vmem [shape: f32[4,128], index: 3, kind: input, shape index: {}]
  %s4 = inlined_call_operand.hbm [shape: f32[200,128], index: 4, kind: output, shape index: {}]
  %s5 = sld [smem:[#allocation0]]
  $region49: #{tpu_custom_call.1} parent=0
    _
  %s7 = ssub.s32 1, %s5
  %s8 = scalar_select 0, %s7, %s5
  $region1: #{tpu_custom_call.1} parent=0
    #allocation2 [shape = 'u8[106496]{0}', space=vmem, size = 0x1a000, scoped, tag = 'output window, operand 0']
    #allocation3 [shape = 's32[2]{0}', space=sflag, size = 0x8, scoped, tag = 'scoped memory for tpu_custom_call.1']
    %9 = vsyncpa [#allocation3], 0
    %s10 = scalar_lea.sflag [#allocation3], 1
    %11 = vsyncpa %s10, 0
    loop: start=0, step=1, limit=4
    $region2: #{tpu_custom_call.1} parent=1 // loop_pre_header
      _
    $region3: #{tpu_custom_call.1} parent=1 // loop_header
      %s13 = sphi 0, %s17
      %p14 = scmp.ge.s32.totalorder %s13, 4
      %s23 = sphi 0, %s25
      %s26 = sphi 0, %s23
      %s27 = sphi 0, %s26
      %s43 = sphi 0, %s27
      %s47 = sphi 0, %s47
      %s49 = sphi 0, %s47
      %s50 = sphi 0, %s49
      %s64 = sphi 0, %s50
      %s68 = sphi 0, %s68
      %s70 = sphi 0, %s68
      %s71 = sphi 0, %s70
      %s85 = sphi 0, %s71
      %s89 = sphi 0, %s89
      %s91 = sphi 0, %s89
      %s92 = sphi 0, %s91
      %s106 = sphi 0, %s92
      %s112 = sphi 0, %s114
      %s115 = sphi 0, %s112
      %s116 = sphi 0, %s115
      %s132 = sphi 0, %s116
    $region4: #{tpu_custom_call.1} parent=1 // loop_header_branch
      %16 = sbr.rel (%p14) target = $region8
    $region5: #{tpu_custom_call.1} parent=1 // loop_body
      %s18 = ssub.s32 %s13, 1
      %s19 = ssub.s32 %s13, 2
      %s20 = sadd.s32 %s13, 1
      %s21 = ssub.s32 %s13, %s20
      %p22 = scmp.eq.s32.totalorder %s21, 0
      %s24 = sadd.s32 %s23, 1
      %s25 = scalar_select %p22, %s23, %s24
      %p28 = pneg %p22
      %p29 = scmp.eq.s32.totalorder %s13, 1
      %p30 = por %p28, %p29
      %p31 = scmp.ne.s32.totalorder %s23, %s26
      %p32 = scmp.eq.s32.totalorder %s13, 0
      %p33 = por %p31, %p32
      %p34 = scmp.ne.s32.totalorder %s23, %s26
      %p35 = scmp.eq.s32.totalorder %s18, 1
      %p36 = por %p34, %p35
      %p37 = scmp.ne.s32.totalorder %s26, %s27
      %p38 = scmp.eq.s32.totalorder %s18, 0
      %p39 = por %p37, %p38
      %p40 = scmp.ne.s32.totalorder %s26, %s27
      %p41 = scmp.eq.s32.totalorder %s19, 1
      %p42 = por %p40, %p41
      %p44 = scmp.ne.s32.totalorder %s27, %s43
      %p45 = scmp.eq.s32.totalorder %s19, 0
      %p46 = por %p44, %p45
      %s48 = sadd.s32 %s47, 1
      %p51 = scmp.eq.s32.totalorder %s13, 1
      %p52 = scmp.ne.s32.totalorder %s47, %s49
      %p53 = scmp.eq.s32.totalorder %s13, 0
      %p54 = por %p52, %p53
      %p55 = scmp.ne.s32.totalorder %s47, %s49
      %p56 = scmp.eq.s32.totalorder %s18, 1
      %p57 = por %p55, %p56
      %p58 = scmp.ne.s32.totalorder %s49, %s50
      %p59 = scmp.eq.s32.totalorder %s18, 0
      %p60 = por %p58, %p59
      %p61 = scmp.ne.s32.totalorder %s49, %s50
      %p62 = scmp.eq.s32.totalorder %s19, 1
      %p63 = por %p61, %p62
      %p65 = scmp.ne.s32.totalorder %s50, %s64
      %p66 = scmp.eq.s32.totalorder %s19, 0
      %p67 = por %p65, %p66
      %s69 = sadd.s32 %s68, 1
      %p72 = scmp.eq.s32.totalorder %s13, 1
      %p73 = scmp.ne.s32.totalorder %s68, %s70
      %p74 = scmp.eq.s32.totalorder %s13, 0
      %p75 = por %p73, %p74
      %p76 = scmp.ne.s32.totalorder %s68, %s70
      %p77 = scmp.eq.s32.totalorder %s18, 1
      %p78 = por %p76, %p77
      %p79 = scmp.ne.s32.totalorder %s70, %s71
      %p80 = scmp.eq.s32.totalorder %s18, 0
      %p81 = por %p79, %p80
      %p82 = scmp.ne.s32.totalorder %s70, %s71
      %p83 = scmp.eq.s32.totalorder %s19, 1
      %p84 = por %p82, %p83
      %p86 = scmp.ne.s32.totalorder %s71, %s85
      %p87 = scmp.eq.s32.totalorder %s19, 0
      %p88 = por %p86, %p87
      %s90 = sadd.s32 %s89, 1
      %p93 = scmp.eq.s32.totalorder %s13, 1
      %p94 = scmp.ne.s32.totalorder %s89, %s91
      %p95 = scmp.eq.s32.totalorder %s13, 0
      %p96 = por %p94, %p95
      %p97 = scmp.ne.s32.totalorder %s89, %s91
      %p98 = scmp.eq.s32.totalorder %s18, 1
      %p99 = por %p97, %p98
      %p100 = scmp.ne.s32.totalorder %s91, %s92
      %p101 = scmp.eq.s32.totalorder %s18, 0
      %p102 = por %p100, %p101
      %p103 = scmp.ne.s32.totalorder %s91, %s92
      %p104 = scmp.eq.s32.totalorder %s19, 1
      %p105 = por %p103, %p104
      %p107 = scmp.ne.s32.totalorder %s92, %s106
      %p108 = scmp.eq.s32.totalorder %s19, 0
      %p109 = por %p107, %p108
      %s110 = ssub.s32 %s13, %s20
      %p111 = scmp.eq.s32.totalorder %s110, 0
      %s113 = sadd.s32 %s112, 1
      %s114 = scalar_select %p111, %s112, %s113
      %p117 = pneg %p111
      %p118 = scmp.eq.s32.totalorder %s13, 1
      %p119 = por %p117, %p118
      %p120 = scmp.ne.s32.totalorder %s112, %s115
      %p121 = scmp.eq.s32.totalorder %s13, 0
      %p122 = por %p120, %p121
      %p123 = scmp.ne.s32.totalorder %s112, %s115
      %p124 = scmp.eq.s32.totalorder %s18, 1
      %p125 = por %p123, %p124
      %p126 = scmp.ne.s32.totalorder %s115, %s116
      %p127 = scmp.eq.s32.totalorder %s18, 0
      %p128 = por %p126, %p127
      %p129 = scmp.ne.s32.totalorder %s115, %s116
      %p130 = scmp.eq.s32.totalorder %s19, 1
      %p131 = por %p129, %p130
      %p133 = scmp.ne.s32.totalorder %s116, %s132
      %p134 = scmp.eq.s32.totalorder %s19, 0
      %p135 = por %p133, %p134
      %p136 = scmp.le.s32.totalorder 1, %s13
      %p137 = scmp.lt.s32.totalorder %s13, 3
      %p138 = pnand %p136, %p137
      %p139 = pneg %p138
      // Predicated region
      $region9: #{tpu_custom_call.1} parent=5 // pred_check
        _
      $region10: #{tpu_custom_call.1} parent=5 // pred_check_branch
        %141 = sbr.rel (%p138) target = $region12
      $region11: #{tpu_custom_call.1} parent=5 // pred_region
        %s142 = ssub.s32 %s13, 1
        // Predicated region
        $region13: #{tpu_custom_call.1} parent=11 // pred_check
          %p143 = pneg %p60
        $region14: #{tpu_custom_call.1} parent=11 // pred_check_branch
          %145 = sbr.rel (%p143) target = $region16
        $region15: #{tpu_custom_call.1} parent=11 // pred_region
          _
        $region16: #{tpu_custom_call.1} parent=11 // pred_fallthru
          _
        // Predicated region
        $region17: #{tpu_custom_call.1} parent=11 // pred_check
          %p146 = pneg %p81
        $region18: #{tpu_custom_call.1} parent=11 // pred_check_branch
          %148 = sbr.rel (%p146) target = $region20
        $region19: #{tpu_custom_call.1} parent=11 // pred_region
          _
        $region20: #{tpu_custom_call.1} parent=11 // pred_fallthru
          _
        // Predicated region
        $region21: #{tpu_custom_call.1} parent=11 // pred_check
          %p149 = pneg %p102
        $region22: #{tpu_custom_call.1} parent=11 // pred_check_branch
          %151 = sbr.rel (%p149) target = $region24
        $region23: #{tpu_custom_call.1} parent=11 // pred_region
          _
        $region24: #{tpu_custom_call.1} parent=11 // pred_fallthru
          _
      $region12: #{tpu_custom_call.1} parent=5 // pred_fallthru
        _
      %p152 = scmp.lt.s32.totalorder %s13, 2
      // Predicated region
      $region25: #{tpu_custom_call.1} parent=5 // pred_check
        %p153 = pneg %p152
      $region26: #{tpu_custom_call.1} parent=5 // pred_check_branch
        %155 = sbr.rel (%p153) target = $region28
      $region27: #{tpu_custom_call.1} parent=5 // pred_region
        // Predicated region
        $region29: #{tpu_custom_call.1} parent=27 // pred_check
          %p156 = pneg %p33
        $region30: #{tpu_custom_call.1} parent=27 // pred_check_branch
          %158 = sbr.rel (%p156) target = $region32
        $region31: #{tpu_custom_call.1} parent=27 // pred_region
          %s159 = smul.u32 13, %s13
          %s160 = ssub.s32 25, %s159
          %p161 = scmp.lt.s32.totalorder %s160, 13
          %s162 = scalar_select %p161, %s160, 13
          %s163 = smul.u32 128, %s162
          %p164 = scmp.lt.s32.totalorder %s159, 24
          %s165 = scalar_select %p164, %s159, 24
          %s166 = smul.addr %s165, 8
          %s167 = scalar_lea.vmem %s0, %s166
          %s168 = smul.u32 13, %s13
          %s169 = ssub.s32 25, %s168
          %p170 = scmp.lt.s32.totalorder %s169, 13
          %s171 = scalar_select %p170, %s169, 13
          %s172 = smul.u32 128, %s171
        $region32: #{tpu_custom_call.1} parent=27 // pred_fallthru
          _
      $region28: #{tpu_custom_call.1} parent=5 // pred_fallthru
        _
      %p173 = scmp.le.s32.totalorder 1, %s13
      %p174 = scmp.lt.s32.totalorder %s13, 3
      %p175 = pnand %p173, %p174
      %p176 = pneg %p175
      // Predicated region
      $region33: #{tpu_custom_call.1} parent=5 // pred_check
        _
      $region34: #{tpu_custom_call.1} parent=5 // pred_check_branch
        %178 = sbr.rel (%p175) target = $region36
      $region35: #{tpu_custom_call.1} parent=5 // pred_region
        %s179 = ssub.s32 %s13, 1
        %s180 = smul.u32 13, %s18
        %s181 = ssub.s32 25, %s180
        %p182 = scmp.lt.s32.totalorder %s181, 13
        %s183 = scalar_select %p182, %s181, 13
        %s184 = smul.u32 128, %s183
        %p185 = scmp.lt.s32.totalorder %s180, 24
        %s186 = scalar_select %p185, %s180, 24
        %s187 = smul.addr %s186, 8
        %s188 = scalar_lea.vmem %s0, %s187
        %p189 = pneg %p39
        %p190 = pneg %p36
        %p191 = pneg %p60
        %p192 = pneg %p57
        %p193 = pneg %p81
        %p194 = pneg %p78
        %p195 = pneg %p102
        %p196 = pneg %p99
        %p197 = pneg %p128
        %p198 = pneg %p125
        %s199 = sand.u32 %s115, 1
        %s200 = scalar_lea.sflag [#allocation3], %s199
        %s201 = sand.u32 %s115, 1
        %s202 = smul.addr %s201, 104
        %s203 = scalar_lea.vmem [#allocation2], %s202
        %s204 = smul.u32 13, %s18
        %s205 = ssub.s32 25, %s204
        %p206 = scmp.lt.s32.totalorder %s205, 13
        %s207 = scalar_select %p206, %s205, 13
        %s208 = smul.u32 128, %s207
        %p209 = scmp.lt.s32.totalorder %s204, 24
        %s210 = scalar_select %p209, %s204, 24
        %s211 = smul.addr %s210, 8
        %s212 = scalar_lea.vmem %s0, %s211
        %s213 = smul.u32 13, %s18
        %s214 = ssub.s32 25, %s213
        %p215 = scmp.lt.s32.totalorder %s214, 13
        %s216 = scalar_select %p215, %s214, 13
        %s217 = smul.u32 128, %s216
        %s218 = smul.u32 13, %s18
        %s219 = ssub.s32 25, %s218
        %p220 = scmp.lt.s32.totalorder %s219, 13
        %s221 = scalar_select %p220, %s219, 13
        %s222 = smul.u32 128, %s221
        %v223 = vld [vmem:[%s3] sm:$0xf]
        %v224 = vld [vmem:[%s212] sm:$0xff]
        %v225 = vld [vmem:[%s212 + $0x8] sm:$0xff]
        %v226 = vld [vmem:[%s212 + $0x10] sm:$0xff]
        %v227 = vld [vmem:[%s212 + $0x18] sm:$0xff]
        %v228 = vld [vmem:[%s212 + $0x20] sm:$0xff]
        %v229 = vld [vmem:[%s212 + $0x28] sm:$0xff]
        %v230 = vld [vmem:[%s212 + $0x30] sm:$0xff]
        %v231 = vld [vmem:[%s212 + $0x38] sm:$0xff]
        %v232 = vld [vmem:[%s212 + $0x40] sm:$0xff]
        %v233 = vld [vmem:[%s212 + $0x48] sm:$0xff]
        %v234 = vld [vmem:[%s212 + $0x50] sm:$0xff]
        %v235 = vld [vmem:[%s212 + $0x58] sm:$0xff]
        %v236 = vld [vmem:[%s212 + $0x60] sm:$0xff]
        %v237 = vld [vmem:[%s1] sm:$0xff]
        %v238 = vld [vmem:[%s1 + $0x8] sm:$0xff]
        %v239 = vld [vmem:[%s1 + $0x10] sm:$0xff]
        %v240 = vld [vmem:[%s1 + $0x18] sm:$0xff]
        %v241 = vlaneseq
        %v242 = vshrl.u32 %v241, 7
        %v243 = vsub.s32 0, %v242
        %v244 = vrot.slane %v223, %v243
        %vm245 = vcmask 261120
        %v247 = vsel %vm245, %v224, 0
        %v250 = vsel %vm245, %v225, 0
        %v253 = vsel %vm245, %v226, 0
        %v256 = vsel %vm245, %v227, 0
        %v259 = vsel %vm245, %v228, 0
        %v262 = vsel %vm245, %v229, 0
        %v265 = vsel %vm245, %v230, 0
        %v268 = vsel %vm245, %v231, 0
        %v271 = vsel %vm245, %v232, 0
        %v274 = vsel %vm245, %v233, 0
        %v277 = vsel %vm245, %v234, 0
        %v280 = vsel %vm245, %v235, 0
        %v283 = vsel %vm245, %v236, 0
        %285 = vmatprep.subr.mxu0 0.0
        %286 = vmatpush1.msra.mxu0 0.0
        %287 = vmatprep.subr.mxu0 0.0
        %288 = vmatpush1.msra.mxu0 0.0
        %289 = vmatprep.subr.mxu0 0.0
        %290 = vmatpush1.msra.mxu0 0.0
        %291 = vmatprep.subr.mxu0 0.0
        %292 = vmatpush1.msra.mxu0 0.0
        %293 = vmatprep.subr.mxu0 0.0
        %294 = vmatpush1.msra.mxu0 0.0
        %295 = vmatprep.subr.mxu0 0.0
        %296 = vmatpush1.msra.mxu0 0.0
        %297 = vmatprep.subr.mxu0 0.0
        %298 = vmatpush1.msra.mxu0 0.0
        %299 = vmatprep.subr.mxu0 0.0
        %300 = vmatpush1.msra.mxu0 0.0
        %301 = vmatprep.subr.mxu0 0.0
        %302 = vmatpush1.msra.mxu0 0.0
        %303 = vmatprep.subr.mxu0 0.0
        %304 = vmatpush1.msra.mxu0 0.0
        %305 = vmatprep.subr.mxu0 0.0
        %306 = vmatpush1.msra.mxu0 0.0
        %307 = vmatprep.subr.mxu0 0.0
        %308 = vmatpush1.msra.mxu0 0.0
        %309 = vmatprep.subr.mxu0 0.0
        %310 = vmatpush1.msra.mxu0 %v240
        %311 = vmatprep.subr.mxu0 0.0
        %312 = vmatpush1.msra.mxu0 %v239
        %313 = vmatprep.subr.mxu0 0.0
        %314 = vmatpush1.msra.mxu0 %v238
        %315 = vmatprep.subr.mxu0 0.0
        %316 = vmatpush1.msra.mxu0 %v237
        %317 = vmatprep.subr.mxu0 0.0
        %318 = vmatpush2.msra.mxu0 0.0
        %319 = vmatprep.subr.mxu0 0.0
        %320 = vmatpush2.msra.mxu0 0.0
        %321 = vmatprep.subr.mxu0 0.0
        %322 = vmatpush2.msra.mxu0 0.0
        %323 = vmatprep.subr.mxu0 0.0
        %324 = vmatpush2.msra.mxu0 0.0
        %325 = vmatprep.subr.mxu0 0.0
        %326 = vmatpush2.msra.mxu0 0.0
        %327 = vmatprep.subr.mxu0 0.0
        %328 = vmatpush2.msra.mxu0 0.0
        %329 = vmatprep.subr.mxu0 0.0
        %330 = vmatpush2.msra.mxu0 0.0
        %331 = vmatprep.subr.mxu0 0.0
        %332 = vmatpush2.msra.mxu0 0.0
        %333 = vmatprep.subr.mxu0 0.0
        %334 = vmatpush2.msra.mxu0 0.0
        %335 = vmatprep.subr.mxu0 0.0
        %336 = vmatpush2.msra.mxu0 0.0
        %337 = vmatprep.subr.mxu0 0.0
        %338 = vmatpush2.msra.mxu0 0.0
        %339 = vmatprep.subr.mxu0 0.0
        %340 = vmatpush2.msra.mxu0 0.0
        %341 = vmatprep.subr.mxu0 0.0
        %342 = vmatpush2.msra.mxu0 0.0
        %343 = vmatprep.subr.mxu0 0.0
        %344 = vmatpush2.msra.mxu0 0.0
        %345 = vmatprep.subr.mxu0 0.0
        %346 = vmatpush2.msra.mxu0 0.0
        %347 = vmatprep.subr.mxu0 0.0
        %348 = vmatpush2.msra.mxu0 0.0
        %349 = vmatprep.mubr.f32.mxu0 0.0
        %350 = vmatmul.mubr.f32.gmra.mxu0 %v247
        %v351 = vpop.f32.mrf.mxu0
        %v352 = vadd.f32 %v244, %v351
        %v353 = vpop.f32.mrf.mxu0
        %354 = vmatprep.mubr.f32.mxu0 0.0
        %355 = vmatmul.mubr.f32.gmra.mxu0 %v250
        %v356 = vpop.f32.mrf.mxu0
        %v357 = vadd.f32 %v244, %v356
        %v358 = vpop.f32.mrf.mxu0
        %359 = vmatprep.mubr.f32.mxu0 0.0
        %360 = vmatmul.mubr.f32.gmra.mxu0 %v253
        %v361 = vpop.f32.mrf.mxu0
        %v362 = vadd.f32 %v244, %v361
        %v363 = vpop.f32.mrf.mxu0
        %364 = vmatprep.mubr.f32.mxu0 0.0
        %365 = vmatmul.mubr.f32.gmra.mxu0 %v256
        %v366 = vpop.f32.mrf.mxu0
        %v367 = vadd.f32 %v244, %v366
        %v368 = vpop.f32.mrf.mxu0
        %369 = vmatprep.mubr.f32.mxu0 0.0
        %370 = vmatmul.mubr.f32.gmra.mxu0 %v259
        %v371 = vpop.f32.mrf.mxu0
        %v372 = vadd.f32 %v244, %v371
        %v373 = vpop.f32.mrf.mxu0
        %374 = vmatprep.mubr.f32.mxu0 0.0
        %375 = vmatmul.mubr.f32.gmra.mxu0 %v262
        %v376 = vpop.f32.mrf.mxu0
        %v377 = vadd.f32 %v244, %v376
        %v378 = vpop.f32.mrf.mxu0
        %379 = vmatprep.mubr.f32.mxu0 0.0
        %380 = vmatmul.mubr.f32.gmra.mxu0 %v265
        %v381 = vpop.f32.mrf.mxu0
        %v382 = vadd.f32 %v244, %v381
        %v383 = vpop.f32.mrf.mxu0
        %384 = vmatprep.mubr.f32.mxu0 0.0
        %385 = vmatmul.mubr.f32.gmra.mxu0 %v268
        %v386 = vpop.f32.mrf.mxu0
        %v387 = vadd.f32 %v244, %v386
        %v388 = vpop.f32.mrf.mxu0
        %389 = vmatprep.mubr.f32.mxu0 0.0
        %390 = vmatmul.mubr.f32.gmra.mxu0 %v271
        %v391 = vpop.f32.mrf.mxu0
        %v392 = vadd.f32 %v244, %v391
        %v393 = vpop.f32.mrf.mxu0
        %394 = vmatprep.mubr.f32.mxu0 0.0
        %395 = vmatmul.mubr.f32.gmra.mxu0 %v274
        %v396 = vpop.f32.mrf.mxu0
        %v397 = vadd.f32 %v244, %v396
        %v398 = vpop.f32.mrf.mxu0
        %399 = vmatprep.mubr.f32.mxu0 0.0
        %400 = vmatmul.mubr.f32.gmra.mxu0 %v277
        %v401 = vpop.f32.mrf.mxu0
        %v402 = vadd.f32 %v244, %v401
        %v403 = vpop.f32.mrf.mxu0
        %404 = vmatprep.mubr.f32.mxu0 0.0
        %405 = vmatmul.mubr.f32.gmra.mxu0 %v280
        %v406 = vpop.f32.mrf.mxu0
        %v407 = vadd.f32 %v244, %v406
        %v408 = vpop.f32.mrf.mxu0
        %409 = vmatprep.mubr.f32.mxu0 0.0
        %410 = vmatmul.mubr.f32.gmra.mxu0 %v283
        %v411 = vpop.f32.mrf.mxu0
        %v412 = vadd.f32 %v244, %v411
        %v413 = vpop.f32.mrf.mxu0
        %414 = vdwg.mxu0
        %v415 = vmul.f32 %v352, 0.5
        %v416 = vmul.f32 %v357, 0.5
        %v417 = vmul.f32 %v362, 0.5
        %v418 = vmul.f32 %v367, 0.5
        %v419 = vmul.f32 %v372, 0.5
        %v420 = vmul.f32 %v377, 0.5
        %v421 = vmul.f32 %v382, 0.5
        %v422 = vmul.f32 %v387, 0.5
        %v423 = vmul.f32 %v392, 0.5
        %v424 = vmul.f32 %v397, 0.5
        %v425 = vmul.f32 %v402, 0.5
        %v426 = vmul.f32 %v407, 0.5
        %v427 = vmul.f32 %v412, 0.5
        %v428 = vmul.f32 %v352, 0.70710677
        %v429 = vmul.f32 %v357, 0.70710677
        %v430 = vmul.f32 %v362, 0.70710677
        %v431 = vmul.f32 %v367, 0.70710677
        %v432 = vmul.f32 %v372, 0.70710677
        %v433 = vmul.f32 %v377, 0.70710677
        %v434 = vmul.f32 %v382, 0.70710677
        %v435 = vmul.f32 %v387, 0.70710677
        %v436 = vmul.f32 %v392, 0.70710677
        %v437 = vmul.f32 %v397, 0.70710677
        %v438 = vmul.f32 %v402, 0.70710677
        %v439 = vmul.f32 %v407, 0.70710677
        %v440 = vmul.f32 %v412, 0.70710677
        %v441 = verf.f32.pop %v428
        %v442 = verf.f32.pop %v429
        %v443 = verf.f32.pop %v430
        %v444 = verf.f32.pop %v431
        %v445 = verf.f32.pop %v432
        %v446 = verf.f32.pop %v433
        %v447 = verf.f32.pop %v434
        %v448 = verf.f32.pop %v435
        %v449 = verf.f32.pop %v436
        %v450 = verf.f32.pop %v437
        %v451 = verf.f32.pop %v438
        %v452 = verf.f32.pop %v439
        %v453 = verf.f32.pop %v440
        %v454 = vadd.f32 %v441, 1.0
        %v455 = vadd.f32 %v442, 1.0
        %v456 = vadd.f32 %v443, 1.0
        %v457 = vadd.f32 %v444, 1.0
        %v458 = vadd.f32 %v445, 1.0
        %v459 = vadd.f32 %v446, 1.0
        %v460 = vadd.f32 %v447, 1.0
        %v461 = vadd.f32 %v448, 1.0
        %v462 = vadd.f32 %v449, 1.0
        %v463 = vadd.f32 %v450, 1.0
        %v464 = vadd.f32 %v451, 1.0
        %v465 = vadd.f32 %v452, 1.0
        %v466 = vadd.f32 %v453, 1.0
        %v467 = vmul.f32 %v415, %v454
        %v468 = vmul.f32 %v416, %v455
        %v469 = vmul.f32 %v417, %v456
        %v470 = vmul.f32 %v418, %v457
        %v471 = vmul.f32 %v419, %v458
        %v472 = vmul.f32 %v420, %v459
        %v473 = vmul.f32 %v421, %v460
        %v474 = vmul.f32 %v422, %v461
        %v475 = vmul.f32 %v423, %v462
        %v476 = vmul.f32 %v424, %v463
        %v477 = vmul.f32 %v425, %v464
        %v478 = vmul.f32 %v426, %v465
        %v479 = vmul.f32 %v427, %v466
        %v480 = vld [vmem:[%s2] sm:$0xff]
        %v481 = vld [vmem:[%s2 + $0x8] sm:$0xff]
        %v482 = vld [vmem:[%s2 + $0x10] sm:$0xff]
        %v483 = vld [vmem:[%s2 + $0x18] sm:$0xff]
        %v484 = vld [vmem:[%s2 + $0x20] sm:$0xff]
        %v485 = vld [vmem:[%s2 + $0x28] sm:$0xff]
        %v486 = vld [vmem:[%s2 + $0x30] sm:$0xff]
        %v487 = vld [vmem:[%s2 + $0x38] sm:$0xff]
        %v488 = vld [vmem:[%s2 + $0x40] sm:$0xff]
        %v489 = vld [vmem:[%s2 + $0x48] sm:$0xff]
        %v490 = vld [vmem:[%s2 + $0x50] sm:$0xff]
        %v491 = vld [vmem:[%s2 + $0x58] sm:$0xff]
        %v492 = vld [vmem:[%s2 + $0x60] sm:$0xff]
        %v493 = vld [vmem:[%s2 + $0x68] sm:$0xff]
        %v494 = vld [vmem:[%s2 + $0x70] sm:$0xff]
        %v495 = vld [vmem:[%s2 + $0x78] sm:$0xff]
        %v496 = vlaneseq
        %v497 = vshrl.u32 %v496, 7
        %v498 = vsub.s32 1, %v497
        %v499 = vrot.slane %v223, %v498
        %500 = vmatprep.subr.mxu0 0.0
        %501 = vmatpush1.msra.mxu0 %v495
        %502 = vmatprep.subr.mxu0 0.0
        %503 = vmatpush1.msra.mxu0 %v494
        %504 = vmatprep.subr.mxu0 0.0
        %505 = vmatpush1.msra.mxu0 %v493
        %506 = vmatprep.subr.mxu0 0.0
        %507 = vmatpush1.msra.mxu0 %v492
        %508 = vmatprep.subr.mxu0 0.0
        %509 = vmatpush1.msra.mxu0 %v491
        %510 = vmatprep.subr.mxu0 0.0
        %511 = vmatpush1.msra.mxu0 %v490
        %512 = vmatprep.subr.mxu0 0.0
        %513 = vmatpush1.msra.mxu0 %v489
        %514 = vmatprep.subr.mxu0 0.0
        %515 = vmatpush1.msra.mxu0 %v488
        %516 = vmatprep.subr.mxu0 0.0
        %517 = vmatpush1.msra.mxu0 %v487
        %518 = vmatprep.subr.mxu0 0.0
        %519 = vmatpush1.msra.mxu0 %v486
        %520 = vmatprep.subr.mxu0 0.0
        %521 = vmatpush1.msra.mxu0 %v485
        %522 = vmatprep.subr.mxu0 0.0
        %523 = vmatpush1.msra.mxu0 %v484
        %524 = vmatprep.subr.mxu0 0.0
        %525 = vmatpush1.msra.mxu0 %v483
        %526 = vmatprep.subr.mxu0 0.0
        %527 = vmatpush1.msra.mxu0 %v482
        %528 = vmatprep.subr.mxu0 0.0
        %529 = vmatpush1.msra.mxu0 %v481
        %530 = vmatprep.subr.mxu0 0.0
        %531 = vmatpush1.msra.mxu0 %v480
        %532 = vmatprep.subr.mxu0 0.0
        %533 = vmatpush2.msra.mxu0 0.0
        %534 = vmatprep.subr.mxu0 0.0
        %535 = vmatpush2.msra.mxu0 0.0
        %536 = vmatprep.subr.mxu0 0.0
        %537 = vmatpush2.msra.mxu0 0.0
        %538 = vmatprep.subr.mxu0 0.0
        %539 = vmatpush2.msra.mxu0 0.0
        %540 = vmatprep.subr.mxu0 0.0
        %541 = vmatpush2.msra.mxu0 0.0
        %542 = vmatprep.subr.mxu0 0.0
        %543 = vmatpush2.msra.mxu0 0.0
        %544 = vmatprep.subr.mxu0 0.0
        %545 = vmatpush2.msra.mxu0 0.0
        %546 = vmatprep.subr.mxu0 0.0
        %547 = vmatpush2.msra.mxu0 0.0
        %548 = vmatprep.subr.mxu0 0.0
        %549 = vmatpush2.msra.mxu0 0.0
        %550 = vmatprep.subr.mxu0 0.0
        %551 = vmatpush2.msra.mxu0 0.0
        %552 = vmatprep.subr.mxu0 0.0
        %553 = vmatpush2.msra.mxu0 0.0
        %554 = vmatprep.subr.mxu0 0.0
        %555 = vmatpush2.msra.mxu0 0.0
        %556 = vmatprep.subr.mxu0 0.0
        %557 = vmatpush2.msra.mxu0 0.0
        %558 = vmatprep.subr.mxu0 0.0
        %559 = vmatpush2.msra.mxu0 0.0
        %560 = vmatprep.subr.mxu0 0.0
        %561 = vmatpush2.msra.mxu0 0.0
        %562 = vmatprep.subr.mxu0 0.0
        %563 = vmatpush2.msra.mxu0 0.0
        %564 = vmatprep.mubr.f32.mxu0 0.0
        %565 = vmatmul.mubr.f32.gmra.mxu0 %v467
        %v566 = vpop.f32.mrf.mxu0
        %v567 = vadd.f32 %v499, %v566
        %v568 = vpop.f32.mrf.mxu0
        %569 = vmatprep.mubr.f32.mxu0 0.0
        %570 = vmatmul.mubr.f32.gmra.mxu0 %v468
        %v571 = vpop.f32.mrf.mxu0
        %v572 = vadd.f32 %v499, %v571
        %v573 = vpop.f32.mrf.mxu0
        %574 = vmatprep.mubr.f32.mxu0 0.0
        %575 = vmatmul.mubr.f32.gmra.mxu0 %v469
        %v576 = vpop.f32.mrf.mxu0
        %v577 = vadd.f32 %v499, %v576
        %v578 = vpop.f32.mrf.mxu0
        %579 = vmatprep.mubr.f32.mxu0 0.0
        %580 = vmatmul.mubr.f32.gmra.mxu0 %v470
        %v581 = vpop.f32.mrf.mxu0
        %v582 = vadd.f32 %v499, %v581
        %v583 = vpop.f32.mrf.mxu0
        %584 = vmatprep.mubr.f32.mxu0 0.0
        %585 = vmatmul.mubr.f32.gmra.mxu0 %v471
        %v586 = vpop.f32.mrf.mxu0
        %v587 = vadd.f32 %v499, %v586
        %v588 = vpop.f32.mrf.mxu0
        %589 = vmatprep.mubr.f32.mxu0 0.0
        %590 = vmatmul.mubr.f32.gmra.mxu0 %v472
        %v591 = vpop.f32.mrf.mxu0
        %v592 = vadd.f32 %v499, %v591
        %v593 = vpop.f32.mrf.mxu0
        %594 = vmatprep.mubr.f32.mxu0 0.0
        %595 = vmatmul.mubr.f32.gmra.mxu0 %v473
        %v596 = vpop.f32.mrf.mxu0
        %v597 = vadd.f32 %v499, %v596
        %v598 = vpop.f32.mrf.mxu0
        %599 = vmatprep.mubr.f32.mxu0 0.0
        %600 = vmatmul.mubr.f32.gmra.mxu0 %v474
        %v601 = vpop.f32.mrf.mxu0
        %v602 = vadd.f32 %v499, %v601
        %v603 = vpop.f32.mrf.mxu0
        %604 = vmatprep.mubr.f32.mxu0 0.0
        %605 = vmatmul.mubr.f32.gmra.mxu0 %v475
        %v606 = vpop.f32.mrf.mxu0
        %v607 = vadd.f32 %v499, %v606
        %v608 = vpop.f32.mrf.mxu0
        %609 = vmatprep.mubr.f32.mxu0 0.0
        %610 = vmatmul.mubr.f32.gmra.mxu0 %v476
        %v611 = vpop.f32.mrf.mxu0
        %v612 = vadd.f32 %v499, %v611
        %v613 = vpop.f32.mrf.mxu0
        %614 = vmatprep.mubr.f32.mxu0 0.0
        %615 = vmatmul.mubr.f32.gmra.mxu0 %v477
        %v616 = vpop.f32.mrf.mxu0
        %v617 = vadd.f32 %v499, %v616
        %v618 = vpop.f32.mrf.mxu0
        %619 = vmatprep.mubr.f32.mxu0 0.0
        %620 = vmatmul.mubr.f32.gmra.mxu0 %v478
        %v621 = vpop.f32.mrf.mxu0
        %v622 = vadd.f32 %v499, %v621
        %v623 = vpop.f32.mrf.mxu0
        %624 = vmatprep.mubr.f32.mxu0 0.0
        %625 = vmatmul.mubr.f32.gmra.mxu0 %v479
        %v626 = vpop.f32.mrf.mxu0
        %v627 = vadd.f32 %v499, %v626
        %v628 = vpop.f32.mrf.mxu0
        %629 = vdwg.mxu0
        %v630 = vadd.f32 %v567, %v352
        %v631 = vadd.f32 %v572, %v357
        %v632 = vadd.f32 %v577, %v362
        %v633 = vadd.f32 %v582, %v367
        %v634 = vadd.f32 %v587, %v372
        %v635 = vadd.f32 %v592, %v377
        %v636 = vadd.f32 %v597, %v382
        %v637 = vadd.f32 %v602, %v387
        %v638 = vadd.f32 %v607, %v392
        %v639 = vadd.f32 %v612, %v397
        %v640 = vadd.f32 %v617, %v402
        %v641 = vadd.f32 %v622, %v407
        %v642 = vadd.f32 %v627, %v412
        %643 = vadd.xlane.f32.xlu0 %v630
        %v644 = vpop.xlane.xlu0 %643
        %645 = vadd.xlane.f32.xlu0 %v631
        %v646 = vpop.xlane.xlu0 %645
        %647 = vadd.xlane.f32.xlu0 %v632
        %v648 = vpop.xlane.xlu0 %647
        %649 = vadd.xlane.f32.xlu0 %v633
        %v650 = vpop.xlane.xlu0 %649
        %651 = vadd.xlane.f32.xlu0 %v634
        %v652 = vpop.xlane.xlu0 %651
        %653 = vadd.xlane.f32.xlu0 %v635
        %v654 = vpop.xlane.xlu0 %653
        %655 = vadd.xlane.f32.xlu0 %v636
        %v656 = vpop.xlane.xlu0 %655
        %657 = vadd.xlane.f32.xlu0 %v637
        %v658 = vpop.xlane.xlu0 %657
        %659 = vadd.xlane.f32.xlu0 %v638
        %v660 = vpop.xlane.xlu0 %659
        %661 = vadd.xlane.f32.xlu0 %v639
        %v662 = vpop.xlane.xlu0 %661
        %663 = vadd.xlane.f32.xlu0 %v640
        %v664 = vpop.xlane.xlu0 %663
        %665 = vadd.xlane.f32.xlu0 %v641
        %v666 = vpop.xlane.xlu0 %665
        %667 = vadd.xlane.f32.xlu0 %v642
        %v668 = vpop.xlane.xlu0 %667
        %v669 = vrcp.pop 128.0
        %v670 = vmul.f32 %v644, %v669
        %v671 = vmul.f32 %v646, %v669
        %v672 = vmul.f32 %v648, %v669
        %v673 = vmul.f32 %v650, %v669
        %v674 = vmul.f32 %v652, %v669
        %v675 = vmul.f32 %v654, %v669
        %v676 = vmul.f32 %v656, %v669
        %v677 = vmul.f32 %v658, %v669
        %v678 = vmul.f32 %v660, %v669
        %v679 = vmul.f32 %v662, %v669
        %v680 = vmul.f32 %v664, %v669
        %v681 = vmul.f32 %v666, %v669
        %v682 = vmul.f32 %v668, %v669
        %v683 = vsub.f32 %v630, %v670
        %v684 = vsub.f32 %v631, %v671
        %v685 = vsub.f32 %v632, %v672
        %v686 = vsub.f32 %v633, %v673
        %v687 = vsub.f32 %v634, %v674
        %v688 = vsub.f32 %v635, %v675
        %v689 = vsub.f32 %v636, %v676
        %v690 = vsub.f32 %v637, %v677
        %v691 = vsub.f32 %v638, %v678
        %v692 = vsub.f32 %v639, %v679
        %v693 = vsub.f32 %v640, %v680
        %v694 = vsub.f32 %v641, %v681
        %v695 = vsub.f32 %v642, %v682
        %v696 = vmul.f32 %v683, %v683
        %v697 = vmul.f32 %v684, %v684
        %v698 = vmul.f32 %v685, %v685
        %v699 = vmul.f32 %v686, %v686
        %v700 = vmul.f32 %v687, %v687
        %v701 = vmul.f32 %v688, %v688
        %v702 = vmul.f32 %v689, %v689
        %v703 = vmul.f32 %v690, %v690
        %v704 = vmul.f32 %v691, %v691
        %v705 = vmul.f32 %v692, %v692
        %v706 = vmul.f32 %v693, %v693
        %v707 = vmul.f32 %v694, %v694
        %v708 = vmul.f32 %v695, %v695
        %709 = vadd.xlane.f32.xlu0 %v696
        %v710 = vpop.xlane.xlu0 %709
        %711 = vadd.xlane.f32.xlu0 %v697
        %v712 = vpop.xlane.xlu0 %711
        %713 = vadd.xlane.f32.xlu0 %v698
        %v714 = vpop.xlane.xlu0 %713
        %715 = vadd.xlane.f32.xlu0 %v699
        %v716 = vpop.xlane.xlu0 %715
        %717 = vadd.xlane.f32.xlu0 %v700
        %v718 = vpop.xlane.xlu0 %717
        %719 = vadd.xlane.f32.xlu0 %v701
        %v720 = vpop.xlane.xlu0 %719
        %721 = vadd.xlane.f32.xlu0 %v702
        %v722 = vpop.xlane.xlu0 %721
        %723 = vadd.xlane.f32.xlu0 %v703
        %v724 = vpop.xlane.xlu0 %723
        %725 = vadd.xlane.f32.xlu0 %v704
        %v726 = vpop.xlane.xlu0 %725
        %727 = vadd.xlane.f32.xlu0 %v705
        %v728 = vpop.xlane.xlu0 %727
        %729 = vadd.xlane.f32.xlu0 %v706
        %v730 = vpop.xlane.xlu0 %729
        %731 = vadd.xlane.f32.xlu0 %v707
        %v732 = vpop.xlane.xlu0 %731
        %733 = vadd.xlane.f32.xlu0 %v708
        %v734 = vpop.xlane.xlu0 %733
        %v735 = vmul.f32 %v710, %v669
        %v736 = vmul.f32 %v712, %v669
        %v737 = vmul.f32 %v714, %v669
        %v738 = vmul.f32 %v716, %v669
        %v739 = vmul.f32 %v718, %v669
        %v740 = vmul.f32 %v720, %v669
        %v741 = vmul.f32 %v722, %v669
        %v742 = vmul.f32 %v724, %v669
        %v743 = vmul.f32 %v726, %v669
        %v744 = vmul.f32 %v728, %v669
        %v745 = vmul.f32 %v730, %v669
        %v746 = vmul.f32 %v732, %v669
        %v747 = vmul.f32 %v734, %v669
        %v748 = vadd.f32 %v735, 1e-05
        %v749 = vadd.f32 %v736, 1e-05
        %v750 = vadd.f32 %v737, 1e-05
        %v751 = vadd.f32 %v738, 1e-05
        %v752 = vadd.f32 %v739, 1e-05
        %v753 = vadd.f32 %v740, 1e-05
        %v754 = vadd.f32 %v741, 1e-05
        %v755 = vadd.f32 %v742, 1e-05
        %v756 = vadd.f32 %v743, 1e-05
        %v757 = vadd.f32 %v744, 1e-05
        %v758 = vadd.f32 %v745, 1e-05
        %v759 = vadd.f32 %v746, 1e-05
        %v760 = vadd.f32 %v747, 1e-05
        %v761 = vrsqrt.pop %v748
        %v762 = vrsqrt.pop %v749
        %v763 = vrsqrt.pop %v750
        %v764 = vrsqrt.pop %v751
        %v765 = vrsqrt.pop %v752
        %v766 = vrsqrt.pop %v753
        %v767 = vrsqrt.pop %v754
        %v768 = vrsqrt.pop %v755
        %v769 = vrsqrt.pop %v756
        %v770 = vrsqrt.pop %v757
        %v771 = vrsqrt.pop %v758
        %v772 = vrsqrt.pop %v759
        %v773 = vrsqrt.pop %v760
        %v774 = vmul.f32 %v683, %v761
        %v775 = vmul.f32 %v684, %v762
        %v776 = vmul.f32 %v685, %v763
        %v777 = vmul.f32 %v686, %v764
        %v778 = vmul.f32 %v687, %v765
        %v779 = vmul.f32 %v688, %v766
        %v780 = vmul.f32 %v689, %v767
        %v781 = vmul.f32 %v690, %v768
        %v782 = vmul.f32 %v691, %v769
        %v783 = vmul.f32 %v692, %v770
        %v784 = vmul.f32 %v693, %v771
        %v785 = vmul.f32 %v694, %v772
        %v786 = vmul.f32 %v695, %v773
        %v787 = vlaneseq
        %v788 = vshrl.u32 %v787, 7
        %v789 = vsub.s32 2, %v788
        %v790 = vrot.slane %v223, %v789
        %v791 = vmul.f32 %v774, %v790
        %v792 = vmul.f32 %v775, %v790
        %v793 = vmul.f32 %v776, %v790
        %v794 = vmul.f32 %v777, %v790
        %v795 = vmul.f32 %v778, %v790
        %v796 = vmul.f32 %v779, %v790
        %v797 = vmul.f32 %v780, %v790
        %v798 = vmul.f32 %v781, %v790
        %v799 = vmul.f32 %v782, %v790
        %v800 = vmul.f32 %v783, %v790
        %v801 = vmul.f32 %v784, %v790
        %v802 = vmul.f32 %v785, %v790
        %v803 = vmul.f32 %v786, %v790
        %v804 = vlaneseq
        %v805 = vshrl.u32 %v804, 7
        %v806 = vsub.s32 3, %v805
        %v807 = vrot.slane %v223, %v806
        %v808 = vadd.f32 %v791, %v807
        %v809 = vadd.f32 %v792, %v807
        %v810 = vadd.f32 %v793, %v807
        %v811 = vadd.f32 %v794, %v807
        %v812 = vadd.f32 %v795, %v807
        %v813 = vadd.f32 %v796, %v807
        %v814 = vadd.f32 %v797, %v807
        %v815 = vadd.f32 %v798, %v807
        %v816 = vadd.f32 %v799, %v807
        %v817 = vadd.f32 %v800, %v807
        %v818 = vadd.f32 %v801, %v807
        %v819 = vadd.f32 %v802, %v807
        %v820 = vadd.f32 %v803, %v807
        %821 = vst [vmem:[%s203] sm:$0xff] %v808
        %822 = vst [vmem:[%s203 + $0x8] sm:$0xff] %v809
        %823 = vst [vmem:[%s203 + $0x10] sm:$0xff] %v810
        %824 = vst [vmem:[%s203 + $0x18] sm:$0xff] %v811
        %825 = vst [vmem:[%s203 + $0x20] sm:$0xff] %v812
        %826 = vst [vmem:[%s203 + $0x28] sm:$0xff] %v813
        %827 = vst [vmem:[%s203 + $0x30] sm:$0xff] %v814
        %828 = vst [vmem:[%s203 + $0x38] sm:$0xff] %v815
        %829 = vst [vmem:[%s203 + $0x40] sm:$0xff] %v816
        %830 = vst [vmem:[%s203 + $0x48] sm:$0xff] %v817
        %831 = vst [vmem:[%s203 + $0x50] sm:$0xff] %v818
        %832 = vst [vmem:[%s203 + $0x58] sm:$0xff] %v819
        %833 = vst [vmem:[%s203 + $0x60] sm:$0xff] %v820
        %s834 = sand.u32 %s115, 1
        %s835 = scalar_lea.sflag [#allocation3], %s834
        %s836 = sand.u32 %s115, 1
        %s837 = smul.addr %s836, 104
        %s838 = scalar_lea.vmem [#allocation2], %s837
        // Predicated region
        $region37: #{tpu_custom_call.1} parent=35 // pred_check
          %p839 = pneg %p125
        $region38: #{tpu_custom_call.1} parent=35 // pred_check_branch
          %841 = sbr.rel (%p839) target = $region40
        $region39: #{tpu_custom_call.1} parent=35 // pred_region
          %s842 = smul.u32 13, %s18
          %s843 = ssub.s32 25, %s842
          %p844 = scmp.lt.s32.totalorder %s843, 13
          %s845 = scalar_select %p844, %s843, 13
          %s846 = smul.u32 128, %s845
          %s848 = ssub.s32 1664, %s846
          %849 = vsyncadd %s835, %s848
          %p850 = scmp.ne.s32.totalorder 0, %s846
          %s851 = smul.addr %s842, 128
          %s852 = scalar_lea.hbm %s4, %s851
          %s853 = smul.u32 8, %s845
          %s854 = sshll.u32 %s838, 4
          %s855 = int_to_ptr.vmem [resolvable:$true] %s854
          %s856 = sshll.u32 %s853, 4
          %860 = dma.vmem_to_hbm [thread:$0]  (%p850), %s855, %s856, %s852, %s835, 128, 128, 8
        $region40: #{tpu_custom_call.1} parent=35 // pred_fallthru
          _
      $region36: #{tpu_custom_call.1} parent=5 // pred_fallthru
        _
      %p861 = scmp.le.s32.totalorder 2, %s13
      // Predicated region
      $region41: #{tpu_custom_call.1} parent=5 // pred_check
        %p862 = pneg %p861
      $region42: #{tpu_custom_call.1} parent=5 // pred_check_branch
        %864 = sbr.rel (%p862) target = $region44
      $region43: #{tpu_custom_call.1} parent=5 // pred_region
        %s865 = ssub.s32 %s13, 2
        // Predicated region
        $region45: #{tpu_custom_call.1} parent=43 // pred_check
          %p866 = pneg %p131
        $region46: #{tpu_custom_call.1} parent=43 // pred_check_branch
          %868 = sbr.rel (%p866) target = $region48
        $region47: #{tpu_custom_call.1} parent=43 // pred_region
          %s869 = sand.u32 %s116, 1
          %s870 = scalar_lea.sflag [#allocation3], %s869
          %s871 = sand.u32 %s116, 1
          %s872 = smul.addr %s871, 104
          %s873 = scalar_lea.vmem [#allocation2], %s872
          %874 = dma.done %s870, 1664
        $region48: #{tpu_custom_call.1} parent=43 // pred_fallthru
          _
      $region44: #{tpu_custom_call.1} parent=5 // pred_fallthru
        _
    $region6: #{tpu_custom_call.1} parent=1 // loop_footer
      %s17 = sadd.s32 1, %s13
    $region7: #{tpu_custom_call.1} parent=1 // loop_footer_branch
      %12 = sbr.rel target = $region3
    $region8: #{tpu_custom_call.1} parent=1 // loop_exit
      _
    %875 = vsyncpa [#allocation3], 1
    %s876 = scalar_lea.sflag [#allocation3], 1
    %877 = vsyncpa %s876, 1

// kernel: tpu_custom_call.1
$region0: #{tpu_custom_call.1}
  #allocation0 [shape = 'u32[]', space=smem, size = 0x4, offset = 0x4, fixed_abs, tag = 'smem constant byte address 0x4 - core index']
  #allocation1 [shape = 'u32[144,128]{1,0:T(1,128)}', space=vmem, size = 0x12000, scoped, tag = 'internal scratch']
  %s0 = inlined_call_operand.vmem [shape: f32[200,32], index: 0, kind: input, shape index: {}]
  %s1 = inlined_call_operand.vmem [shape: f32[32,128], index: 1, kind: input, shape index: {}]
  %s2 = inlined_call_operand.vmem [shape: f32[128,128], index: 2, kind: input, shape index: {}]
  %s3 = inlined_call_operand.vmem [shape: f32[4,128], index: 3, kind: input, shape index: {}]
  %s4 = inlined_call_operand.hbm [shape: f32[200,128], index: 4, kind: output, shape index: {}]
  %s5 = sld [smem:[#allocation0]]
  $region49: #{tpu_custom_call.1} parent=0
    _
  %s7 = ssub.s32 1, %s5
  %s8 = scalar_select 0, %s7, %s5
  $region1: #{tpu_custom_call.1} parent=0
    #allocation2 [shape = 'u8[106496]{0}', space=vmem, size = 0x1a000, scoped, tag = 'output window, operand 0']
    #allocation3 [shape = 's32[2]{0}', space=sflag, size = 0x8, scoped, tag = 'scoped memory for tpu_custom_call.1']
    %9 = vsyncpa [#allocation3], 0
    %s10 = scalar_lea.sflag [#allocation3], 1
    %11 = vsyncpa %s10, 0
    loop: start=0, step=1, limit=4
    $region2: #{tpu_custom_call.1} parent=1 // loop_pre_header
      _
    $region3: #{tpu_custom_call.1} parent=1 // loop_header
      %s13 = sphi 0, %s17
      %p14 = scmp.ge.s32.totalorder %s13, 4
      %s23 = sphi 0, %s25
      %s26 = sphi 0, %s23
      %s27 = sphi 0, %s26
      %s43 = sphi 0, %s27
      %s47 = sphi 0, %s47
      %s49 = sphi 0, %s47
      %s50 = sphi 0, %s49
      %s64 = sphi 0, %s50
      %s68 = sphi 0, %s68
      %s70 = sphi 0, %s68
      %s71 = sphi 0, %s70
      %s85 = sphi 0, %s71
      %s89 = sphi 0, %s89
      %s91 = sphi 0, %s89
      %s92 = sphi 0, %s91
      %s106 = sphi 0, %s92
      %s112 = sphi 0, %s114
      %s115 = sphi 0, %s112
      %s116 = sphi 0, %s115
      %s132 = sphi 0, %s116
    $region4: #{tpu_custom_call.1} parent=1 // loop_header_branch
      %16 = sbr.rel (%p14) target = $region8
    $region5: #{tpu_custom_call.1} parent=1 // loop_body
      %s18 = ssub.s32 %s13, 1
      %s19 = ssub.s32 %s13, 2
      %s20 = sadd.s32 %s13, 1
      %s21 = ssub.s32 %s13, %s20
      %p22 = scmp.eq.s32.totalorder %s21, 0
      %s24 = sadd.s32 %s23, 1
      %s25 = scalar_select %p22, %s23, %s24
      %p28 = pneg %p22
      %p29 = scmp.eq.s32.totalorder %s13, 1
      %p30 = por %p28, %p29
      %p31 = scmp.ne.s32.totalorder %s23, %s26
      %p32 = scmp.eq.s32.totalorder %s13, 0
      %p33 = por %p31, %p32
      %p34 = scmp.ne.s32.totalorder %s23, %s26
      %p35 = scmp.eq.s32.totalorder %s18, 1
      %p36 = por %p34, %p35
      %p37 = scmp.ne.s32.totalorder %s26, %s27
      %p38 = scmp.eq.s32.totalorder %s18, 0
      %p39 = por %p37, %p38
      %p40 = scmp.ne.s32.totalorder %s26, %s27
      %p41 = scmp.eq.s32.totalorder %s19, 1
      %p42 = por %p40, %p41
      %p44 = scmp.ne.s32.totalorder %s27, %s43
      %p45 = scmp.eq.s32.totalorder %s19, 0
      %p46 = por %p44, %p45
      %s48 = sadd.s32 %s47, 1
      %p51 = scmp.eq.s32.totalorder %s13, 1
      %p52 = scmp.ne.s32.totalorder %s47, %s49
      %p53 = scmp.eq.s32.totalorder %s13, 0
      %p54 = por %p52, %p53
      %p55 = scmp.ne.s32.totalorder %s47, %s49
      %p56 = scmp.eq.s32.totalorder %s18, 1
      %p57 = por %p55, %p56
      %p58 = scmp.ne.s32.totalorder %s49, %s50
      %p59 = scmp.eq.s32.totalorder %s18, 0
      %p60 = por %p58, %p59
      %p61 = scmp.ne.s32.totalorder %s49, %s50
      %p62 = scmp.eq.s32.totalorder %s19, 1
      %p63 = por %p61, %p62
      %p65 = scmp.ne.s32.totalorder %s50, %s64
      %p66 = scmp.eq.s32.totalorder %s19, 0
      %p67 = por %p65, %p66
      %s69 = sadd.s32 %s68, 1
      %p72 = scmp.eq.s32.totalorder %s13, 1
      %p73 = scmp.ne.s32.totalorder %s68, %s70
      %p74 = scmp.eq.s32.totalorder %s13, 0
      %p75 = por %p73, %p74
      %p76 = scmp.ne.s32.totalorder %s68, %s70
      %p77 = scmp.eq.s32.totalorder %s18, 1
      %p78 = por %p76, %p77
      %p79 = scmp.ne.s32.totalorder %s70, %s71
      %p80 = scmp.eq.s32.totalorder %s18, 0
      %p81 = por %p79, %p80
      %p82 = scmp.ne.s32.totalorder %s70, %s71
      %p83 = scmp.eq.s32.totalorder %s19, 1
      %p84 = por %p82, %p83
      %p86 = scmp.ne.s32.totalorder %s71, %s85
      %p87 = scmp.eq.s32.totalorder %s19, 0
      %p88 = por %p86, %p87
      %s90 = sadd.s32 %s89, 1
      %p93 = scmp.eq.s32.totalorder %s13, 1
      %p94 = scmp.ne.s32.totalorder %s89, %s91
      %p95 = scmp.eq.s32.totalorder %s13, 0
      %p96 = por %p94, %p95
      %p97 = scmp.ne.s32.totalorder %s89, %s91
      %p98 = scmp.eq.s32.totalorder %s18, 1
      %p99 = por %p97, %p98
      %p100 = scmp.ne.s32.totalorder %s91, %s92
      %p101 = scmp.eq.s32.totalorder %s18, 0
      %p102 = por %p100, %p101
      %p103 = scmp.ne.s32.totalorder %s91, %s92
      %p104 = scmp.eq.s32.totalorder %s19, 1
      %p105 = por %p103, %p104
      %p107 = scmp.ne.s32.totalorder %s92, %s106
      %p108 = scmp.eq.s32.totalorder %s19, 0
      %p109 = por %p107, %p108
      %s110 = ssub.s32 %s13, %s20
      %p111 = scmp.eq.s32.totalorder %s110, 0
      %s113 = sadd.s32 %s112, 1
      %s114 = scalar_select %p111, %s112, %s113
      %p117 = pneg %p111
      %p118 = scmp.eq.s32.totalorder %s13, 1
      %p119 = por %p117, %p118
      %p120 = scmp.ne.s32.totalorder %s112, %s115
      %p121 = scmp.eq.s32.totalorder %s13, 0
      %p122 = por %p120, %p121
      %p123 = scmp.ne.s32.totalorder %s112, %s115
      %p124 = scmp.eq.s32.totalorder %s18, 1
      %p125 = por %p123, %p124
      %p126 = scmp.ne.s32.totalorder %s115, %s116
      %p127 = scmp.eq.s32.totalorder %s18, 0
      %p128 = por %p126, %p127
      %p129 = scmp.ne.s32.totalorder %s115, %s116
      %p130 = scmp.eq.s32.totalorder %s19, 1
      %p131 = por %p129, %p130
      %p133 = scmp.ne.s32.totalorder %s116, %s132
      %p134 = scmp.eq.s32.totalorder %s19, 0
      %p135 = por %p133, %p134
      %p136 = scmp.le.s32.totalorder 1, %s13
      %p137 = scmp.lt.s32.totalorder %s13, 3
      %p138 = pnand %p136, %p137
      %p139 = pneg %p138
      // Predicated region
      $region9: #{tpu_custom_call.1} parent=5 // pred_check
        _
      $region10: #{tpu_custom_call.1} parent=5 // pred_check_branch
        %141 = sbr.rel (%p138) target = $region12
      $region11: #{tpu_custom_call.1} parent=5 // pred_region
        %s142 = ssub.s32 %s13, 1
        // Predicated region
        $region13: #{tpu_custom_call.1} parent=11 // pred_check
          %p143 = pneg %p60
        $region14: #{tpu_custom_call.1} parent=11 // pred_check_branch
          %145 = sbr.rel (%p143) target = $region16
        $region15: #{tpu_custom_call.1} parent=11 // pred_region
          _
        $region16: #{tpu_custom_call.1} parent=11 // pred_fallthru
          _
        // Predicated region
        $region17: #{tpu_custom_call.1} parent=11 // pred_check
          %p146 = pneg %p81
        $region18: #{tpu_custom_call.1} parent=11 // pred_check_branch
          %148 = sbr.rel (%p146) target = $region20
        $region19: #{tpu_custom_call.1} parent=11 // pred_region
          _
        $region20: #{tpu_custom_call.1} parent=11 // pred_fallthru
          _
        // Predicated region
        $region21: #{tpu_custom_call.1} parent=11 // pred_check
          %p149 = pneg %p102
        $region22: #{tpu_custom_call.1} parent=11 // pred_check_branch
          %151 = sbr.rel (%p149) target = $region24
        $region23: #{tpu_custom_call.1} parent=11 // pred_region
          _
        $region24: #{tpu_custom_call.1} parent=11 // pred_fallthru
          _
      $region12: #{tpu_custom_call.1} parent=5 // pred_fallthru
        _
      %p152 = scmp.lt.s32.totalorder %s13, 2
      // Predicated region
      $region25: #{tpu_custom_call.1} parent=5 // pred_check
        %p153 = pneg %p152
      $region26: #{tpu_custom_call.1} parent=5 // pred_check_branch
        %155 = sbr.rel (%p153) target = $region28
      $region27: #{tpu_custom_call.1} parent=5 // pred_region
        // Predicated region
        $region29: #{tpu_custom_call.1} parent=27 // pred_check
          %p156 = pneg %p33
        $region30: #{tpu_custom_call.1} parent=27 // pred_check_branch
          %158 = sbr.rel (%p156) target = $region32
        $region31: #{tpu_custom_call.1} parent=27 // pred_region
          %s159 = smul.u32 13, %s13
          %s160 = ssub.s32 25, %s159
          %p161 = scmp.lt.s32.totalorder %s160, 13
          %s162 = scalar_select %p161, %s160, 13
          %s163 = smul.u32 128, %s162
          %p164 = scmp.lt.s32.totalorder %s159, 24
          %s165 = scalar_select %p164, %s159, 24
          %s166 = smul.addr %s165, 8
          %s167 = scalar_lea.vmem %s0, %s166
          %s168 = smul.u32 13, %s13
          %s169 = ssub.s32 25, %s168
          %p170 = scmp.lt.s32.totalorder %s169, 13
          %s171 = scalar_select %p170, %s169, 13
          %s172 = smul.u32 128, %s171
        $region32: #{tpu_custom_call.1} parent=27 // pred_fallthru
          _
      $region28: #{tpu_custom_call.1} parent=5 // pred_fallthru
        _
      %p173 = scmp.le.s32.totalorder 1, %s13
      %p174 = scmp.lt.s32.totalorder %s13, 3
      %p175 = pnand %p173, %p174
      %p176 = pneg %p175
      // Predicated region
      $region33: #{tpu_custom_call.1} parent=5 // pred_check
        _
      $region34: #{tpu_custom_call.1} parent=5 // pred_check_branch
        %178 = sbr.rel (%p175) target = $region36
      $region35: #{tpu_custom_call.1} parent=5 // pred_region
        %s179 = ssub.s32 %s13, 1
        %s180 = smul.u32 13, %s18
        %s181 = ssub.s32 25, %s180
        %p182 = scmp.lt.s32.totalorder %s181, 13
        %s183 = scalar_select %p182, %s181, 13
        %s184 = smul.u32 128, %s183
        %p185 = scmp.lt.s32.totalorder %s180, 24
        %s186 = scalar_select %p185, %s180, 24
        %s187 = smul.addr %s186, 8
        %s188 = scalar_lea.vmem %s0, %s187
        %p189 = pneg %p39
        %p190 = pneg %p36
        %p191 = pneg %p60
        %p192 = pneg %p57
        %p193 = pneg %p81
        %p194 = pneg %p78
        %p195 = pneg %p102
        %p196 = pneg %p99
        %p197 = pneg %p128
        %p198 = pneg %p125
        %s199 = sand.u32 %s115, 1
        %s200 = scalar_lea.sflag [#allocation3], %s199
        %s201 = sand.u32 %s115, 1
        %s202 = smul.addr %s201, 104
        %s203 = scalar_lea.vmem [#allocation2], %s202
        %s204 = smul.u32 13, %s18
        %s205 = ssub.s32 25, %s204
        %p206 = scmp.lt.s32.totalorder %s205, 13
        %s207 = scalar_select %p206, %s205, 13
        %s208 = smul.u32 128, %s207
        %p209 = scmp.lt.s32.totalorder %s204, 24
        %s210 = scalar_select %p209, %s204, 24
        %s211 = smul.addr %s210, 8
        %s212 = scalar_lea.vmem %s0, %s211
        %s213 = smul.u32 13, %s18
        %s214 = ssub.s32 25, %s213
        %p215 = scmp.lt.s32.totalorder %s214, 13
        %s216 = scalar_select %p215, %s214, 13
        %s217 = smul.u32 128, %s216
        %s218 = smul.u32 13, %s18
        %s219 = ssub.s32 25, %s218
        %p220 = scmp.lt.s32.totalorder %s219, 13
        %s221 = scalar_select %p220, %s219, 13
        %s222 = smul.u32 128, %s221
        %v223 = vld [vmem:[%s3] sm:$0xf]
        %v224 = vld [vmem:[%s212] sm:$0xff]
        %v225 = vld [vmem:[%s212 + $0x8] sm:$0xff]
        %v226 = vld [vmem:[%s212 + $0x10] sm:$0xff]
        %v227 = vld [vmem:[%s212 + $0x18] sm:$0xff]
        %v228 = vld [vmem:[%s212 + $0x20] sm:$0xff]
        %v229 = vld [vmem:[%s212 + $0x28] sm:$0xff]
        %v230 = vld [vmem:[%s212 + $0x30] sm:$0xff]
        %v231 = vld [vmem:[%s212 + $0x38] sm:$0xff]
        %v232 = vld [vmem:[%s212 + $0x40] sm:$0xff]
        %v233 = vld [vmem:[%s212 + $0x48] sm:$0xff]
        %v234 = vld [vmem:[%s212 + $0x50] sm:$0xff]
        %v235 = vld [vmem:[%s212 + $0x58] sm:$0xff]
        %v236 = vld [vmem:[%s212 + $0x60] sm:$0xff]
        %v237 = vld [vmem:[%s1] sm:$0xff]
        %v238 = vld [vmem:[%s1 + $0x8] sm:$0xff]
        %v239 = vld [vmem:[%s1 + $0x10] sm:$0xff]
        %v240 = vld [vmem:[%s1 + $0x18] sm:$0xff]
        %v241 = vlaneseq
        %v242 = vshrl.u32 %v241, 7
        %v243 = vsub.s32 0, %v242
        %v244 = vrot.slane %v223, %v243
        %vm245 = vcmask 261120
        %v247 = vsel %vm245, %v224, 0
        %v250 = vsel %vm245, %v225, 0
        %v253 = vsel %vm245, %v226, 0
        %v256 = vsel %vm245, %v227, 0
        %v259 = vsel %vm245, %v228, 0
        %v262 = vsel %vm245, %v229, 0
        %v265 = vsel %vm245, %v230, 0
        %v268 = vsel %vm245, %v231, 0
        %v271 = vsel %vm245, %v232, 0
        %v274 = vsel %vm245, %v233, 0
        %v277 = vsel %vm245, %v234, 0
        %v280 = vsel %vm245, %v235, 0
        %v283 = vsel %vm245, %v236, 0
        %285 = vmatprep.subr.mxu0 0.0
        %286 = vmatpush1.msra.mxu0 0.0
        %287 = vmatprep.subr.mxu0 0.0
        %288 = vmatpush1.msra.mxu0 0.0
        %289 = vmatprep.subr.mxu0 0.0
        %290 = vmatpush1.msra.mxu0 0.0
        %291 = vmatprep.subr.mxu0 0.0
        %292 = vmatpush1.msra.mxu0 0.0
        %293 = vmatprep.subr.mxu0 0.0
        %294 = vmatpush1.msra.mxu0 0.0
        %295 = vmatprep.subr.mxu0 0.0
        %296 = vmatpush1.msra.mxu0 0.0
        %297 = vmatprep.subr.mxu0 0.0
        %298 = vmatpush1.msra.mxu0 0.0
        %299 = vmatprep.subr.mxu0 0.0
        %300 = vmatpush1.msra.mxu0 0.0
        %301 = vmatprep.subr.mxu0 0.0
        %302 = vmatpush1.msra.mxu0 0.0
        %303 = vmatprep.subr.mxu0 0.0
        %304 = vmatpush1.msra.mxu0 0.0
        %305 = vmatprep.subr.mxu0 0.0
        %306 = vmatpush1.msra.mxu0 0.0
        %307 = vmatprep.subr.mxu0 0.0
        %308 = vmatpush1.msra.mxu0 0.0
        %309 = vmatprep.subr.mxu0 0.0
        %310 = vmatpush1.msra.mxu0 %v240
        %311 = vmatprep.subr.mxu0 0.0
        %312 = vmatpush1.msra.mxu0 %v239
        %313 = vmatprep.subr.mxu0 0.0
        %314 = vmatpush1.msra.mxu0 %v238
        %315 = vmatprep.subr.mxu0 0.0
        %316 = vmatpush1.msra.mxu0 %v237
        %317 = vmatprep.subr.mxu0 0.0
        %318 = vmatpush2.msra.mxu0 0.0
        %319 = vmatprep.subr.mxu0 0.0
        %320 = vmatpush2.msra.mxu0 0.0
        %321 = vmatprep.subr.mxu0 0.0
        %322 = vmatpush2.msra.mxu0 0.0
        %323 = vmatprep.subr.mxu0 0.0
        %324 = vmatpush2.msra.mxu0 0.0
        %325 = vmatprep.subr.mxu0 0.0
        %326 = vmatpush2.msra.mxu0 0.0
        %327 = vmatprep.subr.mxu0 0.0
        %328 = vmatpush2.msra.mxu0 0.0
        %329 = vmatprep.subr.mxu0 0.0
        %330 = vmatpush2.msra.mxu0 0.0
        %331 = vmatprep.subr.mxu0 0.0
        %332 = vmatpush2.msra.mxu0 0.0
        %333 = vmatprep.subr.mxu0 0.0
        %334 = vmatpush2.msra.mxu0 0.0
        %335 = vmatprep.subr.mxu0 0.0
        %336 = vmatpush2.msra.mxu0 0.0
        %337 = vmatprep.subr.mxu0 0.0
        %338 = vmatpush2.msra.mxu0 0.0
        %339 = vmatprep.subr.mxu0 0.0
        %340 = vmatpush2.msra.mxu0 0.0
        %341 = vmatprep.subr.mxu0 0.0
        %342 = vmatpush2.msra.mxu0 0.0
        %343 = vmatprep.subr.mxu0 0.0
        %344 = vmatpush2.msra.mxu0 0.0
        %345 = vmatprep.subr.mxu0 0.0
        %346 = vmatpush2.msra.mxu0 0.0
        %347 = vmatprep.subr.mxu0 0.0
        %348 = vmatpush2.msra.mxu0 0.0
        %349 = vmatprep.mubr.f32.mxu0 0.0
        %350 = vmatmul.mubr.f32.gmra.mxu0 %v247
        %v351 = vpop.f32.mrf.mxu0
        %v352 = vadd.f32 %v244, %v351
        %v353 = vpop.f32.mrf.mxu0
        %354 = vmatprep.mubr.f32.mxu0 0.0
        %355 = vmatmul.mubr.f32.gmra.mxu0 %v250
        %v356 = vpop.f32.mrf.mxu0
        %v357 = vadd.f32 %v244, %v356
        %v358 = vpop.f32.mrf.mxu0
        %359 = vmatprep.mubr.f32.mxu0 0.0
        %360 = vmatmul.mubr.f32.gmra.mxu0 %v253
        %v361 = vpop.f32.mrf.mxu0
        %v362 = vadd.f32 %v244, %v361
        %v363 = vpop.f32.mrf.mxu0
        %364 = vmatprep.mubr.f32.mxu0 0.0
        %365 = vmatmul.mubr.f32.gmra.mxu0 %v256
        %v366 = vpop.f32.mrf.mxu0
        %v367 = vadd.f32 %v244, %v366
        %v368 = vpop.f32.mrf.mxu0
        %369 = vmatprep.mubr.f32.mxu0 0.0
        %370 = vmatmul.mubr.f32.gmra.mxu0 %v259
        %v371 = vpop.f32.mrf.mxu0
        %v372 = vadd.f32 %v244, %v371
        %v373 = vpop.f32.mrf.mxu0
        %374 = vmatprep.mubr.f32.mxu0 0.0
        %375 = vmatmul.mubr.f32.gmra.mxu0 %v262
        %v376 = vpop.f32.mrf.mxu0
        %v377 = vadd.f32 %v244, %v376
        %v378 = vpop.f32.mrf.mxu0
        %379 = vmatprep.mubr.f32.mxu0 0.0
        %380 = vmatmul.mubr.f32.gmra.mxu0 %v265
        %v381 = vpop.f32.mrf.mxu0
        %v382 = vadd.f32 %v244, %v381
        %v383 = vpop.f32.mrf.mxu0
        %384 = vmatprep.mubr.f32.mxu0 0.0
        %385 = vmatmul.mubr.f32.gmra.mxu0 %v268
        %v386 = vpop.f32.mrf.mxu0
        %v387 = vadd.f32 %v244, %v386
        %v388 = vpop.f32.mrf.mxu0
        %389 = vmatprep.mubr.f32.mxu0 0.0
        %390 = vmatmul.mubr.f32.gmra.mxu0 %v271
        %v391 = vpop.f32.mrf.mxu0
        %v392 = vadd.f32 %v244, %v391
        %v393 = vpop.f32.mrf.mxu0
        %394 = vmatprep.mubr.f32.mxu0 0.0
        %395 = vmatmul.mubr.f32.gmra.mxu0 %v274
        %v396 = vpop.f32.mrf.mxu0
        %v397 = vadd.f32 %v244, %v396
        %v398 = vpop.f32.mrf.mxu0
        %399 = vmatprep.mubr.f32.mxu0 0.0
        %400 = vmatmul.mubr.f32.gmra.mxu0 %v277
        %v401 = vpop.f32.mrf.mxu0
        %v402 = vadd.f32 %v244, %v401
        %v403 = vpop.f32.mrf.mxu0
        %404 = vmatprep.mubr.f32.mxu0 0.0
        %405 = vmatmul.mubr.f32.gmra.mxu0 %v280
        %v406 = vpop.f32.mrf.mxu0
        %v407 = vadd.f32 %v244, %v406
        %v408 = vpop.f32.mrf.mxu0
        %409 = vmatprep.mubr.f32.mxu0 0.0
        %410 = vmatmul.mubr.f32.gmra.mxu0 %v283
        %v411 = vpop.f32.mrf.mxu0
        %v412 = vadd.f32 %v244, %v411
        %v413 = vpop.f32.mrf.mxu0
        %414 = vdwg.mxu0
        %v415 = vmul.f32 %v352, 0.5
        %v416 = vmul.f32 %v357, 0.5
        %v417 = vmul.f32 %v362, 0.5
        %v418 = vmul.f32 %v367, 0.5
        %v419 = vmul.f32 %v372, 0.5
        %v420 = vmul.f32 %v377, 0.5
        %v421 = vmul.f32 %v382, 0.5
        %v422 = vmul.f32 %v387, 0.5
        %v423 = vmul.f32 %v392, 0.5
        %v424 = vmul.f32 %v397, 0.5
        %v425 = vmul.f32 %v402, 0.5
        %v426 = vmul.f32 %v407, 0.5
        %v427 = vmul.f32 %v412, 0.5
        %v428 = vmul.f32 %v352, 0.70710677
        %v429 = vmul.f32 %v357, 0.70710677
        %v430 = vmul.f32 %v362, 0.70710677
        %v431 = vmul.f32 %v367, 0.70710677
        %v432 = vmul.f32 %v372, 0.70710677
        %v433 = vmul.f32 %v377, 0.70710677
        %v434 = vmul.f32 %v382, 0.70710677
        %v435 = vmul.f32 %v387, 0.70710677
        %v436 = vmul.f32 %v392, 0.70710677
        %v437 = vmul.f32 %v397, 0.70710677
        %v438 = vmul.f32 %v402, 0.70710677
        %v439 = vmul.f32 %v407, 0.70710677
        %v440 = vmul.f32 %v412, 0.70710677
        %v441 = verf.f32.pop %v428
        %v442 = verf.f32.pop %v429
        %v443 = verf.f32.pop %v430
        %v444 = verf.f32.pop %v431
        %v445 = verf.f32.pop %v432
        %v446 = verf.f32.pop %v433
        %v447 = verf.f32.pop %v434
        %v448 = verf.f32.pop %v435
        %v449 = verf.f32.pop %v436
        %v450 = verf.f32.pop %v437
        %v451 = verf.f32.pop %v438
        %v452 = verf.f32.pop %v439
        %v453 = verf.f32.pop %v440
        %v454 = vadd.f32 %v441, 1.0
        %v455 = vadd.f32 %v442, 1.0
        %v456 = vadd.f32 %v443, 1.0
        %v457 = vadd.f32 %v444, 1.0
        %v458 = vadd.f32 %v445, 1.0
        %v459 = vadd.f32 %v446, 1.0
        %v460 = vadd.f32 %v447, 1.0
        %v461 = vadd.f32 %v448, 1.0
        %v462 = vadd.f32 %v449, 1.0
        %v463 = vadd.f32 %v450, 1.0
        %v464 = vadd.f32 %v451, 1.0
        %v465 = vadd.f32 %v452, 1.0
        %v466 = vadd.f32 %v453, 1.0
        %v467 = vmul.f32 %v415, %v454
        %v468 = vmul.f32 %v416, %v455
        %v469 = vmul.f32 %v417, %v456
        %v470 = vmul.f32 %v418, %v457
        %v471 = vmul.f32 %v419, %v458
        %v472 = vmul.f32 %v420, %v459
        %v473 = vmul.f32 %v421, %v460
        %v474 = vmul.f32 %v422, %v461
        %v475 = vmul.f32 %v423, %v462
        %v476 = vmul.f32 %v424, %v463
        %v477 = vmul.f32 %v425, %v464
        %v478 = vmul.f32 %v426, %v465
        %v479 = vmul.f32 %v427, %v466
        %v480 = vld [vmem:[%s2] sm:$0xff]
        %v481 = vld [vmem:[%s2 + $0x8] sm:$0xff]
        %v482 = vld [vmem:[%s2 + $0x10] sm:$0xff]
        %v483 = vld [vmem:[%s2 + $0x18] sm:$0xff]
        %v484 = vld [vmem:[%s2 + $0x20] sm:$0xff]
        %v485 = vld [vmem:[%s2 + $0x28] sm:$0xff]
        %v486 = vld [vmem:[%s2 + $0x30] sm:$0xff]
        %v487 = vld [vmem:[%s2 + $0x38] sm:$0xff]
        %v488 = vld [vmem:[%s2 + $0x40] sm:$0xff]
        %v489 = vld [vmem:[%s2 + $0x48] sm:$0xff]
        %v490 = vld [vmem:[%s2 + $0x50] sm:$0xff]
        %v491 = vld [vmem:[%s2 + $0x58] sm:$0xff]
        %v492 = vld [vmem:[%s2 + $0x60] sm:$0xff]
        %v493 = vld [vmem:[%s2 + $0x68] sm:$0xff]
        %v494 = vld [vmem:[%s2 + $0x70] sm:$0xff]
        %v495 = vld [vmem:[%s2 + $0x78] sm:$0xff]
        %v496 = vlaneseq
        %v497 = vshrl.u32 %v496, 7
        %v498 = vsub.s32 1, %v497
        %v499 = vrot.slane %v223, %v498
        %500 = vmatprep.subr.mxu0 0.0
        %501 = vmatpush1.msra.mxu0 %v495
        %502 = vmatprep.subr.mxu0 0.0
        %503 = vmatpush1.msra.mxu0 %v494
        %504 = vmatprep.subr.mxu0 0.0
        %505 = vmatpush1.msra.mxu0 %v493
        %506 = vmatprep.subr.mxu0 0.0
        %507 = vmatpush1.msra.mxu0 %v492
        %508 = vmatprep.subr.mxu0 0.0
        %509 = vmatpush1.msra.mxu0 %v491
        %510 = vmatprep.subr.mxu0 0.0
        %511 = vmatpush1.msra.mxu0 %v490
        %512 = vmatprep.subr.mxu0 0.0
        %513 = vmatpush1.msra.mxu0 %v489
        %514 = vmatprep.subr.mxu0 0.0
        %515 = vmatpush1.msra.mxu0 %v488
        %516 = vmatprep.subr.mxu0 0.0
        %517 = vmatpush1.msra.mxu0 %v487
        %518 = vmatprep.subr.mxu0 0.0
        %519 = vmatpush1.msra.mxu0 %v486
        %520 = vmatprep.subr.mxu0 0.0
        %521 = vmatpush1.msra.mxu0 %v485
        %522 = vmatprep.subr.mxu0 0.0
        %523 = vmatpush1.msra.mxu0 %v484
        %524 = vmatprep.subr.mxu0 0.0
        %525 = vmatpush1.msra.mxu0 %v483
        %526 = vmatprep.subr.mxu0 0.0
        %527 = vmatpush1.msra.mxu0 %v482
        %528 = vmatprep.subr.mxu0 0.0
        %529 = vmatpush1.msra.mxu0 %v481
        %530 = vmatprep.subr.mxu0 0.0
        %531 = vmatpush1.msra.mxu0 %v480
        %532 = vmatprep.subr.mxu0 0.0
        %533 = vmatpush2.msra.mxu0 0.0
        %534 = vmatprep.subr.mxu0 0.0
        %535 = vmatpush2.msra.mxu0 0.0
        %536 = vmatprep.subr.mxu0 0.0
        %537 = vmatpush2.msra.mxu0 0.0
        %538 = vmatprep.subr.mxu0 0.0
        %539 = vmatpush2.msra.mxu0 0.0
        %540 = vmatprep.subr.mxu0 0.0
        %541 = vmatpush2.msra.mxu0 0.0
        %542 = vmatprep.subr.mxu0 0.0
        %543 = vmatpush2.msra.mxu0 0.0
        %544 = vmatprep.subr.mxu0 0.0
        %545 = vmatpush2.msra.mxu0 0.0
        %546 = vmatprep.subr.mxu0 0.0
        %547 = vmatpush2.msra.mxu0 0.0
        %548 = vmatprep.subr.mxu0 0.0
        %549 = vmatpush2.msra.mxu0 0.0
        %550 = vmatprep.subr.mxu0 0.0
        %551 = vmatpush2.msra.mxu0 0.0
        %552 = vmatprep.subr.mxu0 0.0
        %553 = vmatpush2.msra.mxu0 0.0
        %554 = vmatprep.subr.mxu0 0.0
        %555 = vmatpush2.msra.mxu0 0.0
        %556 = vmatprep.subr.mxu0 0.0
        %557 = vmatpush2.msra.mxu0 0.0
        %558 = vmatprep.subr.mxu0 0.0
        %559 = vmatpush2.msra.mxu0 0.0
        %560 = vmatprep.subr.mxu0 0.0
        %561 = vmatpush2.msra.mxu0 0.0
        %562 = vmatprep.subr.mxu0 0.0
        %563 = vmatpush2.msra.mxu0 0.0
        %564 = vmatprep.mubr.f32.mxu0 0.0
        %565 = vmatmul.mubr.f32.gmra.mxu0 %v467
        %v566 = vpop.f32.mrf.mxu0
        %v567 = vadd.f32 %v499, %v566
        %v568 = vpop.f32.mrf.mxu0
        %569 = vmatprep.mubr.f32.mxu0 0.0
        %570 = vmatmul.mubr.f32.gmra.mxu0 %v468
        %v571 = vpop.f32.mrf.mxu0
        %v572 = vadd.f32 %v499, %v571
        %v573 = vpop.f32.mrf.mxu0
        %574 = vmatprep.mubr.f32.mxu0 0.0
        %575 = vmatmul.mubr.f32.gmra.mxu0 %v469
        %v576 = vpop.f32.mrf.mxu0
        %v577 = vadd.f32 %v499, %v576
        %v578 = vpop.f32.mrf.mxu0
        %579 = vmatprep.mubr.f32.mxu0 0.0
        %580 = vmatmul.mubr.f32.gmra.mxu0 %v470
        %v581 = vpop.f32.mrf.mxu0
        %v582 = vadd.f32 %v499, %v581
        %v583 = vpop.f32.mrf.mxu0
        %584 = vmatprep.mubr.f32.mxu0 0.0
        %585 = vmatmul.mubr.f32.gmra.mxu0 %v471
        %v586 = vpop.f32.mrf.mxu0
        %v587 = vadd.f32 %v499, %v586
        %v588 = vpop.f32.mrf.mxu0
        %589 = vmatprep.mubr.f32.mxu0 0.0
        %590 = vmatmul.mubr.f32.gmra.mxu0 %v472
        %v591 = vpop.f32.mrf.mxu0
        %v592 = vadd.f32 %v499, %v591
        %v593 = vpop.f32.mrf.mxu0
        %594 = vmatprep.mubr.f32.mxu0 0.0
        %595 = vmatmul.mubr.f32.gmra.mxu0 %v473
        %v596 = vpop.f32.mrf.mxu0
        %v597 = vadd.f32 %v499, %v596
        %v598 = vpop.f32.mrf.mxu0
        %599 = vmatprep.mubr.f32.mxu0 0.0
        %600 = vmatmul.mubr.f32.gmra.mxu0 %v474
        %v601 = vpop.f32.mrf.mxu0
        %v602 = vadd.f32 %v499, %v601
        %v603 = vpop.f32.mrf.mxu0
        %604 = vmatprep.mubr.f32.mxu0 0.0
        %605 = vmatmul.mubr.f32.gmra.mxu0 %v475
        %v606 = vpop.f32.mrf.mxu0
        %v607 = vadd.f32 %v499, %v606
        %v608 = vpop.f32.mrf.mxu0
        %609 = vmatprep.mubr.f32.mxu0 0.0
        %610 = vmatmul.mubr.f32.gmra.mxu0 %v476
        %v611 = vpop.f32.mrf.mxu0
        %v612 = vadd.f32 %v499, %v611
        %v613 = vpop.f32.mrf.mxu0
        %614 = vmatprep.mubr.f32.mxu0 0.0
        %615 = vmatmul.mubr.f32.gmra.mxu0 %v477
        %v616 = vpop.f32.mrf.mxu0
        %v617 = vadd.f32 %v499, %v616
        %v618 = vpop.f32.mrf.mxu0
        %619 = vmatprep.mubr.f32.mxu0 0.0
        %620 = vmatmul.mubr.f32.gmra.mxu0 %v478
        %v621 = vpop.f32.mrf.mxu0
        %v622 = vadd.f32 %v499, %v621
        %v623 = vpop.f32.mrf.mxu0
        %624 = vmatprep.mubr.f32.mxu0 0.0
        %625 = vmatmul.mubr.f32.gmra.mxu0 %v479
        %v626 = vpop.f32.mrf.mxu0
        %v627 = vadd.f32 %v499, %v626
        %v628 = vpop.f32.mrf.mxu0
        %629 = vdwg.mxu0
        %v630 = vadd.f32 %v567, %v352
        %v631 = vadd.f32 %v572, %v357
        %v632 = vadd.f32 %v577, %v362
        %v633 = vadd.f32 %v582, %v367
        %v634 = vadd.f32 %v587, %v372
        %v635 = vadd.f32 %v592, %v377
        %v636 = vadd.f32 %v597, %v382
        %v637 = vadd.f32 %v602, %v387
        %v638 = vadd.f32 %v607, %v392
        %v639 = vadd.f32 %v612, %v397
        %v640 = vadd.f32 %v617, %v402
        %v641 = vadd.f32 %v622, %v407
        %v642 = vadd.f32 %v627, %v412
        %643 = vadd.xlane.f32.xlu0 %v630
        %v644 = vpop.xlane.xlu0 %643
        %645 = vadd.xlane.f32.xlu0 %v631
        %v646 = vpop.xlane.xlu0 %645
        %647 = vadd.xlane.f32.xlu0 %v632
        %v648 = vpop.xlane.xlu0 %647
        %649 = vadd.xlane.f32.xlu0 %v633
        %v650 = vpop.xlane.xlu0 %649
        %651 = vadd.xlane.f32.xlu0 %v634
        %v652 = vpop.xlane.xlu0 %651
        %653 = vadd.xlane.f32.xlu0 %v635
        %v654 = vpop.xlane.xlu0 %653
        %655 = vadd.xlane.f32.xlu0 %v636
        %v656 = vpop.xlane.xlu0 %655
        %657 = vadd.xlane.f32.xlu0 %v637
        %v658 = vpop.xlane.xlu0 %657
        %659 = vadd.xlane.f32.xlu0 %v638
        %v660 = vpop.xlane.xlu0 %659
        %661 = vadd.xlane.f32.xlu0 %v639
        %v662 = vpop.xlane.xlu0 %661
        %663 = vadd.xlane.f32.xlu0 %v640
        %v664 = vpop.xlane.xlu0 %663
        %665 = vadd.xlane.f32.xlu0 %v641
        %v666 = vpop.xlane.xlu0 %665
        %667 = vadd.xlane.f32.xlu0 %v642
        %v668 = vpop.xlane.xlu0 %667
        %v669 = vrcp.pop 128.0
        %v670 = vmul.f32 %v644, %v669
        %v671 = vmul.f32 %v646, %v669
        %v672 = vmul.f32 %v648, %v669
        %v673 = vmul.f32 %v650, %v669
        %v674 = vmul.f32 %v652, %v669
        %v675 = vmul.f32 %v654, %v669
        %v676 = vmul.f32 %v656, %v669
        %v677 = vmul.f32 %v658, %v669
        %v678 = vmul.f32 %v660, %v669
        %v679 = vmul.f32 %v662, %v669
        %v680 = vmul.f32 %v664, %v669
        %v681 = vmul.f32 %v666, %v669
        %v682 = vmul.f32 %v668, %v669
        %v683 = vsub.f32 %v630, %v670
        %v684 = vsub.f32 %v631, %v671
        %v685 = vsub.f32 %v632, %v672
        %v686 = vsub.f32 %v633, %v673
        %v687 = vsub.f32 %v634, %v674
        %v688 = vsub.f32 %v635, %v675
        %v689 = vsub.f32 %v636, %v676
        %v690 = vsub.f32 %v637, %v677
        %v691 = vsub.f32 %v638, %v678
        %v692 = vsub.f32 %v639, %v679
        %v693 = vsub.f32 %v640, %v680
        %v694 = vsub.f32 %v641, %v681
        %v695 = vsub.f32 %v642, %v682
        %v696 = vmul.f32 %v683, %v683
        %v697 = vmul.f32 %v684, %v684
        %v698 = vmul.f32 %v685, %v685
        %v699 = vmul.f32 %v686, %v686
        %v700 = vmul.f32 %v687, %v687
        %v701 = vmul.f32 %v688, %v688
        %v702 = vmul.f32 %v689, %v689
        %v703 = vmul.f32 %v690, %v690
        %v704 = vmul.f32 %v691, %v691
        %v705 = vmul.f32 %v692, %v692
        %v706 = vmul.f32 %v693, %v693
        %v707 = vmul.f32 %v694, %v694
        %v708 = vmul.f32 %v695, %v695
        %709 = vadd.xlane.f32.xlu0 %v696
        %v710 = vpop.xlane.xlu0 %709
        %711 = vadd.xlane.f32.xlu0 %v697
        %v712 = vpop.xlane.xlu0 %711
        %713 = vadd.xlane.f32.xlu0 %v698
        %v714 = vpop.xlane.xlu0 %713
        %715 = vadd.xlane.f32.xlu0 %v699
        %v716 = vpop.xlane.xlu0 %715
        %717 = vadd.xlane.f32.xlu0 %v700
        %v718 = vpop.xlane.xlu0 %717
        %719 = vadd.xlane.f32.xlu0 %v701
        %v720 = vpop.xlane.xlu0 %719
        %721 = vadd.xlane.f32.xlu0 %v702
        %v722 = vpop.xlane.xlu0 %721
        %723 = vadd.xlane.f32.xlu0 %v703
        %v724 = vpop.xlane.xlu0 %723
        %725 = vadd.xlane.f32.xlu0 %v704
        %v726 = vpop.xlane.xlu0 %725
        %727 = vadd.xlane.f32.xlu0 %v705
        %v728 = vpop.xlane.xlu0 %727
        %729 = vadd.xlane.f32.xlu0 %v706
        %v730 = vpop.xlane.xlu0 %729
        %731 = vadd.xlane.f32.xlu0 %v707
        %v732 = vpop.xlane.xlu0 %731
        %733 = vadd.xlane.f32.xlu0 %v708
        %v734 = vpop.xlane.xlu0 %733
        %v735 = vmul.f32 %v710, %v669
        %v736 = vmul.f32 %v712, %v669
        %v737 = vmul.f32 %v714, %v669
        %v738 = vmul.f32 %v716, %v669
        %v739 = vmul.f32 %v718, %v669
        %v740 = vmul.f32 %v720, %v669
        %v741 = vmul.f32 %v722, %v669
        %v742 = vmul.f32 %v724, %v669
        %v743 = vmul.f32 %v726, %v669
        %v744 = vmul.f32 %v728, %v669
        %v745 = vmul.f32 %v730, %v669
        %v746 = vmul.f32 %v732, %v669
        %v747 = vmul.f32 %v734, %v669
        %v748 = vadd.f32 %v735, 1e-05
        %v749 = vadd.f32 %v736, 1e-05
        %v750 = vadd.f32 %v737, 1e-05
        %v751 = vadd.f32 %v738, 1e-05
        %v752 = vadd.f32 %v739, 1e-05
        %v753 = vadd.f32 %v740, 1e-05
        %v754 = vadd.f32 %v741, 1e-05
        %v755 = vadd.f32 %v742, 1e-05
        %v756 = vadd.f32 %v743, 1e-05
        %v757 = vadd.f32 %v744, 1e-05
        %v758 = vadd.f32 %v745, 1e-05
        %v759 = vadd.f32 %v746, 1e-05
        %v760 = vadd.f32 %v747, 1e-05
        %v761 = vrsqrt.pop %v748
        %v762 = vrsqrt.pop %v749
        %v763 = vrsqrt.pop %v750
        %v764 = vrsqrt.pop %v751
        %v765 = vrsqrt.pop %v752
        %v766 = vrsqrt.pop %v753
        %v767 = vrsqrt.pop %v754
        %v768 = vrsqrt.pop %v755
        %v769 = vrsqrt.pop %v756
        %v770 = vrsqrt.pop %v757
        %v771 = vrsqrt.pop %v758
        %v772 = vrsqrt.pop %v759
        %v773 = vrsqrt.pop %v760
        %v774 = vmul.f32 %v683, %v761
        %v775 = vmul.f32 %v684, %v762
        %v776 = vmul.f32 %v685, %v763
        %v777 = vmul.f32 %v686, %v764
        %v778 = vmul.f32 %v687, %v765
        %v779 = vmul.f32 %v688, %v766
        %v780 = vmul.f32 %v689, %v767
        %v781 = vmul.f32 %v690, %v768
        %v782 = vmul.f32 %v691, %v769
        %v783 = vmul.f32 %v692, %v770
        %v784 = vmul.f32 %v693, %v771
        %v785 = vmul.f32 %v694, %v772
        %v786 = vmul.f32 %v695, %v773
        %v787 = vlaneseq
        %v788 = vshrl.u32 %v787, 7
        %v789 = vsub.s32 2, %v788
        %v790 = vrot.slane %v223, %v789
        %v791 = vmul.f32 %v774, %v790
        %v792 = vmul.f32 %v775, %v790
        %v793 = vmul.f32 %v776, %v790
        %v794 = vmul.f32 %v777, %v790
        %v795 = vmul.f32 %v778, %v790
        %v796 = vmul.f32 %v779, %v790
        %v797 = vmul.f32 %v780, %v790
        %v798 = vmul.f32 %v781, %v790
        %v799 = vmul.f32 %v782, %v790
        %v800 = vmul.f32 %v783, %v790
        %v801 = vmul.f32 %v784, %v790
        %v802 = vmul.f32 %v785, %v790
        %v803 = vmul.f32 %v786, %v790
        %v804 = vlaneseq
        %v805 = vshrl.u32 %v804, 7
        %v806 = vsub.s32 3, %v805
        %v807 = vrot.slane %v223, %v806
        %v808 = vadd.f32 %v791, %v807
        %v809 = vadd.f32 %v792, %v807
        %v810 = vadd.f32 %v793, %v807
        %v811 = vadd.f32 %v794, %v807
        %v812 = vadd.f32 %v795, %v807
        %v813 = vadd.f32 %v796, %v807
        %v814 = vadd.f32 %v797, %v807
        %v815 = vadd.f32 %v798, %v807
        %v816 = vadd.f32 %v799, %v807
        %v817 = vadd.f32 %v800, %v807
        %v818 = vadd.f32 %v801, %v807
        %v819 = vadd.f32 %v802, %v807
        %v820 = vadd.f32 %v803, %v807
        %821 = vst [vmem:[%s203] sm:$0xff] %v808
        %822 = vst [vmem:[%s203 + $0x8] sm:$0xff] %v809
        %823 = vst [vmem:[%s203 + $0x10] sm:$0xff] %v810
        %824 = vst [vmem:[%s203 + $0x18] sm:$0xff] %v811
        %825 = vst [vmem:[%s203 + $0x20] sm:$0xff] %v812
        %826 = vst [vmem:[%s203 + $0x28] sm:$0xff] %v813
        %827 = vst [vmem:[%s203 + $0x30] sm:$0xff] %v814
        %828 = vst [vmem:[%s203 + $0x38] sm:$0xff] %v815
        %829 = vst [vmem:[%s203 + $0x40] sm:$0xff] %v816
        %830 = vst [vmem:[%s203 + $0x48] sm:$0xff] %v817
        %831 = vst [vmem:[%s203 + $0x50] sm:$0xff] %v818
        %832 = vst [vmem:[%s203 + $0x58] sm:$0xff] %v819
        %833 = vst [vmem:[%s203 + $0x60] sm:$0xff] %v820
        %s834 = sand.u32 %s115, 1
        %s835 = scalar_lea.sflag [#allocation3], %s834
        %s836 = sand.u32 %s115, 1
        %s837 = smul.addr %s836, 104
        %s838 = scalar_lea.vmem [#allocation2], %s837
        // Predicated region
        $region37: #{tpu_custom_call.1} parent=35 // pred_check
          %p839 = pneg %p125
        $region38: #{tpu_custom_call.1} parent=35 // pred_check_branch
          %841 = sbr.rel (%p839) target = $region40
        $region39: #{tpu_custom_call.1} parent=35 // pred_region
          %s842 = smul.u32 13, %s18
          %s843 = ssub.s32 25, %s842
          %p844 = scmp.lt.s32.totalorder %s843, 13
          %s845 = scalar_select %p844, %s843, 13
          %s846 = smul.u32 128, %s845
          %s848 = ssub.s32 1664, %s846
          %849 = vsyncadd %s835, %s848
          %p850 = scmp.ne.s32.totalorder 0, %s846
          %s851 = smul.addr %s842, 128
          %s852 = scalar_lea.hbm %s4, %s851
          %s853 = smul.u32 8, %s845
          %s854 = sshll.u32 %s838, 4
          %s855 = int_to_ptr.vmem [resolvable:$true] %s854
          %s856 = sshll.u32 %s853, 4
          %860 = dma.vmem_to_hbm [thread:$0]  (%p850), %s855, %s856, %s852, %s835, 128, 128, 8
        $region40: #{tpu_custom_call.1} parent=35 // pred_fallthru
          _
      $region36: #{tpu_custom_call.1} parent=5 // pred_fallthru
        _
      %p861 = scmp.le.s32.totalorder 2, %s13
      // Predicated region
      $region41: #{tpu_custom_call.1} parent=5 // pred_check
        %p862 = pneg %p861
      $region42: #{tpu_custom_call.1} parent=5 // pred_check_branch
        %864 = sbr.rel (%p862) target = $region44
      $region43: #{tpu_custom_call.1} parent=5 // pred_region
        %s865 = ssub.s32 %s13, 2
        // Predicated region
        $region45: #{tpu_custom_call.1} parent=43 // pred_check
          %p866 = pneg %p131
        $region46: #{tpu_custom_call.1} parent=43 // pred_check_branch
          %868 = sbr.rel (%p866) target = $region48
        $region47: #{tpu_custom_call.1} parent=43 // pred_region
          %s869 = sand.u32 %s116, 1
          %s870 = scalar_lea.sflag [#allocation3], %s869
          %s871 = sand.u32 %s116, 1
          %s872 = smul.addr %s871, 104
          %s873 = scalar_lea.vmem [#allocation2], %s872
          %874 = dma.done %s870, 1664
        $region48: #{tpu_custom_call.1} parent=43 // pred_fallthru
          _
      $region44: #{tpu_custom_call.1} parent=5 // pred_fallthru
        _
    $region6: #{tpu_custom_call.1} parent=1 // loop_footer
      %s17 = sadd.s32 1, %s13
    $region7: #{tpu_custom_call.1} parent=1 // loop_footer_branch
      %12 = sbr.rel target = $region3
    $region8: #{tpu_custom_call.1} parent=1 // loop_exit
      _
    %875 = vsyncpa [#allocation3], 1
    %s876 = scalar_lea.sflag [#allocation3], 1
    %877 = vsyncpa %s876, 1

</llo_original>
